<compile_context>
chip_gen: v7x
topology: tpu7x:2x2x1
jax: 0.10.0
libtpu: 0.0.40
codegen_flags: <defaults>
</compile_context>

<pallas_src>
import functools

import jax
import jax.numpy as jnp
from jax.experimental import pallas as pl
from jax.experimental.pallas import tpu as pltpu

_LANE = 128


def _round_up(x, m):
    return ((x + m - 1) // m) * m


def _row_tile(h, cap=8):
    """Largest divisor of h that is <= cap (row-tile height)."""
    for t in range(min(cap, h), 0, -1):
        if h % t == 0:
            return t
    return 1


# ---------------------------------------------------------------------------
# Kernel 1/2: [optional BN+ReLU on input] -> 3x3 conv -> per-tile BN moments
# ---------------------------------------------------------------------------
def _conv3x3_stats_kernel(x_ref, w_ref, scale_ref, shift_ref, out_ref, mom_ref,
                          *, H, W, Th, apply_input_act, pad_out_w):
    """One (image, row-tile) grid step.

    x_ref     : (H, W+2, Cin_p)    bf16, W-halo columns already zero
    w_ref     : (9*Cin_p, Cout_p)  bf16, tap-major flattened 3x3 weights
    scale_ref : (1, 1, Cin_p)      f32 BN scale for the INPUT (stage-2 only)
    shift_ref : (1, 1, Cin_p)      f32 BN shift for the INPUT (stage-2 only)
    out_ref   : (Th, Wout, Cout_p) raw conv output (Wout = W+2 if pad_out_w else W)
    mom_ref   : (2, Cout_p)        per-tile [sum, sum_of_squares] over Th*W pixels
    """
    r = pl.program_id(1)
    Cin_p = x_ref.shape[-1]
    Cout_p = out_ref.shape[-1]
    Wp2 = W + 2

    row0 = r * Th
    # Halo'd row window: clamp the boundary reads, mask them to zero below.
    top = x_ref[pl.ds(jnp.maximum(row0 - 1, 0), 1)]       # (1,  W+2, Cin_p)
    mid = x_ref[pl.ds(row0, Th)]                          # (Th, W+2, Cin_p)
    bot = x_ref[pl.ds(jnp.minimum(row0 + Th, H - 1), 1)]  # (1,  W+2, Cin_p)
    slab = jnp.concatenate([top, mid, bot], axis=0)       # (Th+2, W+2, Cin_p)

    if apply_input_act:
        # Fused BN+ReLU of the previous stage, applied to this conv's input.
        slab = jnp.maximum(
            slab.astype(jnp.float32) * scale_ref[...] + shift_ref[...], 0.0)

    # Zero the halo AFTER the affine so the conv sees zero-padding of the
    # *activated* tensor, exactly as PyTorch's padded conv does.
    row_id = row0 - 1 + jax.lax.broadcasted_iota(jnp.int32, (Th + 2, 1, 1), 0)
    col_id = jax.lax.broadcasted_iota(jnp.int32, (1, Wp2, 1), 1)
    valid = (row_id >= 0) & (row_id < H) & (col_id >= 1) & (col_id <= W)
    slab = (slab * valid.astype(slab.dtype)).astype(jnp.bfloat16)

    # im2col: one lane-dense MXU matmul, K = 9 * Cin_p.
    taps = [slab[kh:kh + Th, kw:kw + W, :]
            for kh in range(3) for kw in range(3)]
    patch = jnp.concatenate(taps, axis=-1).reshape(Th * W, 9 * Cin_p)
    acc = jnp.dot(patch, w_ref[...], preferred_element_type=jnp.float32)

    # One-pass BN statistics for this tile (reduced across the grid in JAX).
    s = jnp.sum(acc, axis=0, keepdims=True)
    ss = jnp.sum(acc * acc, axis=0, keepdims=True)
    mom_ref[...] = jnp.concatenate([s, ss], axis=0)

    res = acc.reshape(Th, W, Cout_p)
    if pad_out_w:
        # Store the W halo columns (zeros) directly, so the next stage never
        # needs an external jnp.pad pass over the intermediate.
        z = jnp.zeros((Th, 1, Cout_p), dtype=res.dtype)
        res = jnp.concatenate([z, res, z], axis=1)
    out_ref[...] = res.astype(out_ref.dtype)


def _conv_stage(x, w_flat, scale_in, shift_in, *, H, W, Th,
                apply_input_act, pad_out_w, out_dtype):
    N = x.shape[0]
    Cin_p = x.shape[-1]
    Cout_p = w_flat.shape[-1]
    nR = H // Th
    Wout = W + 2 if pad_out_w else W
    assert x.shape[2] == W + 2

    kernel = functools.partial(
        _conv3x3_stats_kernel, H=H, W=W, Th=Th,
        apply_input_act=apply_input_act, pad_out_w=pad_out_w)

    conv, mom = pl.pallas_call(
        kernel,
        grid=(N, nR),
        in_specs=[
            # Full (padded-W) image for batch n; resident across the row axis.
            pl.BlockSpec((None, H, W + 2, Cin_p), lambda n, r: (n, 0, 0, 0)),
            pl.BlockSpec((9 * Cin_p, Cout_p), lambda n, r: (0, 0)),
            pl.BlockSpec((1, 1, Cin_p), lambda n, r: (0, 0, 0)),
            pl.BlockSpec((1, 1, Cin_p), lambda n, r: (0, 0, 0)),
        ],
        out_specs=[
            pl.BlockSpec((None, Th, Wout, Cout_p), lambda n, r: (n, r, 0, 0)),
            pl.BlockSpec((None, None, 2, Cout_p), lambda n, r: (n, r, 0, 0)),
        ],
        out_shape=[
            jax.ShapeDtypeStruct((N, H, Wout, Cout_p), out_dtype),
            jax.ShapeDtypeStruct((N, nR, 2, Cout_p), jnp.float32),
        ],
        compiler_params=pltpu.CompilerParams(
            dimension_semantics=("parallel", "parallel")),
    )(x, w_flat, scale_in, shift_in)
    return conv, mom


# ---------------------------------------------------------------------------
# Kernel 3: final BN + ReLU (lane-dense elementwise)
# ---------------------------------------------------------------------------
def _bn_relu_kernel(x_ref, scale_ref, shift_ref, o_ref):
    y = x_ref[...].astype(jnp.float32) * scale_ref[...] + shift_ref[...]
    o_ref[...] = jnp.maximum(y, 0.0).astype(o_ref.dtype)


def _bn_relu_stage(x, scale, shift, *, Th):
    N, H, W, C = x.shape
    nR = H // Th
    return pl.pallas_call(
        _bn_relu_kernel,
        grid=(N, nR),
        in_specs=[
            pl.BlockSpec((None, Th, W, C), lambda n, r: (n, r, 0, 0)),
            pl.BlockSpec((1, 1, C), lambda n, r: (0, 0, 0)),
            pl.BlockSpec((1, 1, C), lambda n, r: (0, 0, 0)),
        ],
        out_specs=pl.BlockSpec((None, Th, W, C), lambda n, r: (n, r, 0, 0)),
        out_shape=jax.ShapeDtypeStruct((N, H, W, C), jnp.float32),
        compiler_params=pltpu.CompilerParams(
            dimension_semantics=("parallel", "parallel")),
    )(x, scale, shift)


# ---------------------------------------------------------------------------
# Host-side glue
# ---------------------------------------------------------------------------
def _bn_affine(mom, gamma, beta, count, eps):
    """Reduce per-tile (sum, sum_sq) moments -> per-channel (scale, shift)."""
    s = jnp.sum(mom[:, :, 0, :], axis=(0, 1))
    ss = jnp.sum(mom[:, :, 1, :], axis=(0, 1))
    mean = s / count
    var = jnp.maximum(ss / count - mean * mean, 0.0)
    scale = gamma * jax.lax.rsqrt(var + eps)
    shift = beta - mean * scale
    c = scale.shape[0]
    return (scale.reshape(1, 1, c).astype(jnp.float32),
            shift.reshape(1, 1, c).astype(jnp.float32))


def vgg_block(x_nchw, params, *, eps=1e-5, row_tile_cap=8):
    """Full VGGBlock forward. Input/output NCHW to match the PyTorch module."""
    N, Cin, H, W = x_nchw.shape
    w1, w2 = params["w1"], params["w2"]          # (3,3,Cin,Cmid), (3,3,Cmid,Cout)
    Cmid, Cout = w1.shape[-1], w2.shape[-1]
    Cin_p = _round_up(Cin, _LANE)
    Cmid_p = _round_up(Cmid, _LANE)
    Cout_p = _round_up(Cout, _LANE)
    Th = _row_tile(H, row_tile_cap)
    count = float(N * H * W)

    # NCHW -> NHWC, zero W-halo columns, pad channels to lane width, bf16.
    x = jnp.transpose(x_nchw, (0, 2, 3, 1))
    x = jnp.pad(x, ((0, 0), (0, 0), (1, 1), (0, Cin_p - Cin))).astype(jnp.bfloat16)

    def prep_w(w, cp_in, cp_out):
        _, _, ci, co = w.shape
        w = jnp.pad(w, ((0, 0), (0, 0), (0, cp_in - ci), (0, cp_out - co)))
        return w.reshape(9 * cp_in, cp_out).astype(jnp.bfloat16)

    w1f = prep_w(w1, Cin_p, Cmid_p)
    w2f = prep_w(w2, Cmid_p, Cout_p)
    g1 = jnp.pad(params["g1"], (0, Cmid_p - Cmid))
    be1 = jnp.pad(params["beta1"], (0, Cmid_p - Cmid))
    g2 = jnp.pad(params["g2"], (0, Cout_p - Cout))
    be2 = jnp.pad(params["beta2"], (0, Cout_p - Cout))
    # Conv biases b1/b2 are intentionally dropped: a per-channel constant added
    # before training-mode BatchNorm cancels exactly in (x - mean).

    ones_in = jnp.ones((1, 1, Cin_p), jnp.float32)
    zeros_in = jnp.zeros((1, 1, Cin_p), jnp.float32)

    # Stage 1: conv1 (raw) + per-tile moments; W-padded bf16 intermediate.
    conv1, mom1 = _conv_stage(x, w1f, ones_in, zeros_in, H=H, W=W, Th=Th,
                              apply_input_act=False, pad_out_w=True,
                              out_dtype=jnp.bfloat16)
    scale1, shift1 = _bn_affine(mom1, g1, be1, count, eps)

    # Stage 2: BN1+ReLU fused into the input load, conv2 (raw) + moments.
    conv2, mom2 = _conv_stage(conv1, w2f, scale1, shift1, H=H, W=W, Th=Th,
                              apply_input_act=True, pad_out_w=False,
                              out_dtype=jnp.float32)
    scale2, shift2 = _bn_affine(mom2, g2, be2, count, eps)

    # Stage 3: BN2 + ReLU.
    y = _bn_relu_stage(conv2, scale2, shift2, Th=Th)     # (N, H, W, Cout_p) f32

    return jnp.transpose(y[..., :Cout], (0, 3, 1, 2))    # NHWC -> NCHW


# ---------------------------------------------------------------------------
# Pure-JAX reference (lax conv + training-mode BN + ReLU), with conv biases.
# ---------------------------------------------------------------------------
def _reference(x_nchw, params, *, eps=1e-5):
    def stage(x, w_hwio, b, g, beta):
        w_oihw = jnp.transpose(w_hwio, (3, 2, 0, 1))
        y = jax.lax.conv_general_dilated(
            x, w_oihw, window_strides=(1, 1), padding=((1, 1), (1, 1)),
            dimension_numbers=("NCHW", "OIHW", "NCHW"))
        y = y + b[None, :, None, None]
        mean = jnp.mean(y, axis=(0, 2, 3), keepdims=True)
        var = jnp.mean((y - mean) ** 2, axis=(0, 2, 3), keepdims=True)
        y = (y - mean) * jax.lax.rsqrt(var + eps)
        y = y * g[None, :, None, None] + beta[None, :, None, None]
        return jnp.maximum(y, 0.0)

    h = stage(x_nchw, params["w1"], params["b1"], params["g1"], params["beta1"])
    h = stage(h, params["w2"], params["b2"], params["g2"], params["beta2"])
    return h


if __name__ == "__main__":
    # VGGBlock(in_channels=4, middle_channels=8, out_channels=8) at small shapes.
    N, Cin, H, W = 2, 4, 16, 16
    Cmid, Cout = 8, 8

    key = jax.random.PRNGKey(0)
    kx, k1, k2, k3, k4, k5, k6, k7, k8 = jax.random.split(key, 9)

    x = jax.random.normal(kx, (N, Cin, H, W), dtype=jnp.float32)

    params = {
        "w1": 0.1 * jax.random.normal(k1, (3, 3, Cin, Cmid), dtype=jnp.float32),
        "b1": 0.1 * jax.random.normal(k2, (Cmid,), dtype=jnp.float32),
        "g1": 1.0 + 0.1 * jax.random.normal(k3, (Cmid,), dtype=jnp.float32),
        "beta1": 0.1 * jax.random.normal(k4, (Cmid,), dtype=jnp.float32),
        "w2": 0.1 * jax.random.normal(k5, (3, 3, Cmid, Cout), dtype=jnp.float32),
        "b2": 0.1 * jax.random.normal(k6, (Cout,), dtype=jnp.float32),
        "g2": 1.0 + 0.1 * jax.random.normal(k7, (Cout,), dtype=jnp.float32),
        "beta2": 0.1 * jax.random.normal(k8, (Cout,), dtype=jnp.float32),
    }

    out = jax.block_until_ready(vgg_block(x, params))
    assert out.shape == (N, Cout, H, W), out.shape

    ref = jax.block_until_ready(_reference(x, params))
    # Tolerance accounts for bf16 MXU operands and the bf16 stage-1 intermediate.
    max_err = float(jnp.max(jnp.abs(out - ref)))
    assert max_err < 5e-2, f"mismatch vs reference: {max_err}"

    print("KERNEL_OK")
</pallas_src>

<mosaic_0001>
module attributes {stable_mosaic.version = 11 : i64} {
  func.func @_conv3x3_stats_kernel(%arg0: i32, %arg1: i32, %arg2: memref<1x16x18x128xbf16, #tpu.memory_space<vmem>>, %arg3: memref<1152x128xbf16, #tpu.memory_space<vmem>>, %arg4: memref<1x1x128xf32, #tpu.memory_space<vmem>>, %arg5: memref<1x1x128xf32, #tpu.memory_space<vmem>>, %arg6: memref<1x8x18x128xbf16, #tpu.memory_space<vmem>>, %arg7: memref<1x1x2x128xf32, #tpu.memory_space<vmem>>) attributes {dimension_semantics = [#tpu.dimension_semantics<parallel>, #tpu.dimension_semantics<parallel>], iteration_bounds = array<i64: 2, 2>, scalar_prefetch = 0 : i64, scratch_operands = 0 : i64, tpu.core_type = #tpu.core_type<tc>, window_params = [{transform_indices = @transform_0, window_bounds = array<i64: 1, 16, 18, 128>}, {pipeline_mode = #tpu.pipeline_mode<synchronous>, transform_indices = @transform_1, window_bounds = array<i64: 1152, 128>}, {pipeline_mode = #tpu.pipeline_mode<synchronous>, transform_indices = @transform_2, window_bounds = array<i64: 1, 1, 128>}, {pipeline_mode = #tpu.pipeline_mode<synchronous>, transform_indices = @transform_3, window_bounds = array<i64: 1, 1, 128>}, {transform_indices = @transform_4, window_bounds = array<i64: 1, 8, 18, 128>}, {transform_indices = @transform_5, window_bounds = array<i64: 1, 1, 2, 128>}]} {
    %c8_i32 = arith.constant 8 : i32
    %0 = arith.muli %arg1, %c8_i32 : i32
    %c1_i32 = arith.constant 1 : i32
    %1 = arith.subi %0, %c1_i32 : i32
    %c0_i32 = arith.constant 0 : i32
    %2 = arith.maxsi %1, %c0_i32 : i32
    %c0 = arith.constant 0 : index
    %3 = arith.index_cast %2 : i32 to index
    %c0_0 = arith.constant 0 : index
    %c0_1 = arith.constant 0 : index
    %4 = vector.load %arg2[%c0, %3, %c0_0, %c0_1] : memref<1x16x18x128xbf16, #tpu.memory_space<vmem>>, vector<1x1x18x128xbf16>
    %5 = vector.shape_cast %4 : vector<1x1x18x128xbf16> to vector<1x18x128xbf16>
    %c0_2 = arith.constant 0 : index
    %6 = arith.index_cast %0 : i32 to index
    %c0_3 = arith.constant 0 : index
    %c0_4 = arith.constant 0 : index
    %7 = vector.load %arg2[%c0_2, %6, %c0_3, %c0_4] : memref<1x16x18x128xbf16, #tpu.memory_space<vmem>>, vector<1x8x18x128xbf16>
    %8 = vector.shape_cast %7 : vector<1x8x18x128xbf16> to vector<8x18x128xbf16>
    %c8_i32_5 = arith.constant 8 : i32
    %9 = arith.addi %0, %c8_i32_5 : i32
    %c15_i32 = arith.constant 15 : i32
    %10 = arith.minsi %9, %c15_i32 : i32
    %c0_6 = arith.constant 0 : index
    %11 = arith.index_cast %10 : i32 to index
    %c0_7 = arith.constant 0 : index
    %c0_8 = arith.constant 0 : index
    %12 = vector.load %arg2[%c0_6, %11, %c0_7, %c0_8] : memref<1x16x18x128xbf16, #tpu.memory_space<vmem>>, vector<1x1x18x128xbf16>
    %13 = vector.shape_cast %12 : vector<1x1x18x128xbf16> to vector<1x18x128xbf16>
    %14 = tpu.concatenate %5, %8, %13 in 0 : vector<1x18x128xbf16>, vector<8x18x128xbf16>, vector<1x18x128xbf16> -> vector<10x18x128xbf16>
    %c1_i32_9 = arith.constant 1 : i32
    %15 = arith.subi %0, %c1_i32_9 : i32
    %16 = tpu.iota {dimensions = array<i32: 0>} : vector<10x1x1xi32>
    %17 = vector.broadcast %15 : i32 to vector<10x1x1xi32>
    %18 = arith.addi %17, %16 : vector<10x1x1xi32>
    %19 = tpu.iota {dimensions = array<i32: 1>} : vector<1x18x1xi32>
    %c0_i32_10 = arith.constant 0 : i32
    %20 = vector.broadcast %c0_i32_10 : i32 to vector<10x1x1xi32>
    %21 = arith.cmpi sge, %18, %20 : vector<10x1x1xi32>
    %c16_i32 = arith.constant 16 : i32
    %22 = vector.broadcast %c16_i32 : i32 to vector<10x1x1xi32>
    %23 = arith.cmpi slt, %18, %22 : vector<10x1x1xi32>
    %24 = arith.andi %21, %23 : vector<10x1x1xi1>
    %c1_i32_11 = arith.constant 1 : i32
    %25 = vector.broadcast %c1_i32_11 : i32 to vector<1x18x1xi32>
    %26 = arith.cmpi sge, %19, %25 : vector<1x18x1xi32>
    %27 = vector.broadcast %24 : vector<10x1x1xi1> to vector<10x18x1xi1>
    %28 = vector.broadcast %26 : vector<1x18x1xi1> to vector<10x18x1xi1>
    %29 = arith.andi %27, %28 : vector<10x18x1xi1>
    %c16_i32_12 = arith.constant 16 : i32
    %30 = vector.broadcast %c16_i32_12 : i32 to vector<1x18x1xi32>
    %31 = arith.cmpi sle, %19, %30 : vector<1x18x1xi32>
    %32 = vector.broadcast %31 : vector<1x18x1xi1> to vector<10x18x1xi1>
    %33 = arith.andi %29, %32 : vector<10x18x1xi1>
    %34 = arith.extui %33 : vector<10x18x1xi1> to vector<10x18x1xi32>
    %35 = arith.sitofp %34 : vector<10x18x1xi32> to vector<10x18x1xf32>
    %36 = arith.truncf %35 : vector<10x18x1xf32> to vector<10x18x1xbf16>
    %37 = vector.broadcast %36 : vector<10x18x1xbf16> to vector<10x18x128xbf16>
    %38 = arith.mulf %14, %37 : vector<10x18x128xbf16>
    %39 = vector.extract_strided_slice %38 {offsets = [0, 0, 0], sizes = [8, 16, 128], strides = [1, 1, 1]} : vector<10x18x128xbf16> to vector<8x16x128xbf16>
    %40 = vector.extract_strided_slice %38 {offsets = [0, 1, 0], sizes = [8, 16, 128], strides = [1, 1, 1]} : vector<10x18x128xbf16> to vector<8x16x128xbf16>
    %41 = vector.extract_strided_slice %38 {offsets = [0, 2, 0], sizes = [8, 16, 128], strides = [1, 1, 1]} : vector<10x18x128xbf16> to vector<8x16x128xbf16>
    %42 = vector.extract_strided_slice %38 {offsets = [1, 0, 0], sizes = [8, 16, 128], strides = [1, 1, 1]} : vector<10x18x128xbf16> to vector<8x16x128xbf16>
    %43 = vector.extract_strided_slice %38 {offsets = [1, 1, 0], sizes = [8, 16, 128], strides = [1, 1, 1]} : vector<10x18x128xbf16> to vector<8x16x128xbf16>
    %44 = vector.extract_strided_slice %38 {offsets = [1, 2, 0], sizes = [8, 16, 128], strides = [1, 1, 1]} : vector<10x18x128xbf16> to vector<8x16x128xbf16>
    %45 = vector.extract_strided_slice %38 {offsets = [2, 0, 0], sizes = [8, 16, 128], strides = [1, 1, 1]} : vector<10x18x128xbf16> to vector<8x16x128xbf16>
    %46 = vector.extract_strided_slice %38 {offsets = [2, 1, 0], sizes = [8, 16, 128], strides = [1, 1, 1]} : vector<10x18x128xbf16> to vector<8x16x128xbf16>
    %47 = vector.extract_strided_slice %38 {offsets = [2, 2, 0], sizes = [8, 16, 128], strides = [1, 1, 1]} : vector<10x18x128xbf16> to vector<8x16x128xbf16>
    %48 = tpu.concatenate %39, %40, %41, %42, %43, %44, %45, %46, %47 in 2 : vector<8x16x128xbf16>, vector<8x16x128xbf16>, vector<8x16x128xbf16>, vector<8x16x128xbf16>, vector<8x16x128xbf16>, vector<8x16x128xbf16>, vector<8x16x128xbf16>, vector<8x16x128xbf16>, vector<8x16x128xbf16> -> vector<8x16x1152xbf16>
    %49 = vector.shape_cast %48 : vector<8x16x1152xbf16> to vector<128x1152xbf16>
    %c0_13 = arith.constant 0 : index
    %c0_14 = arith.constant 0 : index
    %50 = vector.load %arg3[%c0_13, %c0_14] : memref<1152x128xbf16, #tpu.memory_space<vmem>>, vector<1152x128xbf16>
    %cst = arith.constant dense<0.000000e+00> : vector<128x128xf32>
    %51 = tpu.matmul %49, %50, %cst {dimension_numbers = #tpu.dot_dimension_numbers<[1], [0], [0], [1], [0, 0, 1, 1], [], []>} : vector<128x1152xbf16>, vector<1152x128xbf16>, vector<128x128xf32> -> vector<128x128xf32>
    %cst_15 = arith.constant dense<0.000000e+00> : vector<128xf32>
    %52 = vector.multi_reduction <add>, %51, %cst_15 [0] : vector<128x128xf32> to vector<128xf32>
    %53 = vector.shape_cast %52 : vector<128xf32> to vector<1x128xf32>
    %54 = arith.mulf %51, %51 : vector<128x128xf32>
    %cst_16 = arith.constant dense<0.000000e+00> : vector<128xf32>
    %55 = vector.multi_reduction <add>, %54, %cst_16 [0] : vector<128x128xf32> to vector<128xf32>
    %56 = vector.shape_cast %55 : vector<128xf32> to vector<1x128xf32>
    %57 = tpu.concatenate %53, %56 in 0 : vector<1x128xf32>, vector<1x128xf32> -> vector<2x128xf32>
    %c0_17 = arith.constant 0 : index
    %c0_18 = arith.constant 0 : index
    %c0_19 = arith.constant 0 : index
    %c0_20 = arith.constant 0 : index
    %58 = vector.load %arg7[%c0_17, %c0_18, %c0_19, %c0_20] : memref<1x1x2x128xf32, #tpu.memory_space<vmem>>, vector<1x1x2x128xf32>
    %59 = vector.shape_cast %58 : vector<1x1x2x128xf32> to vector<2x128xf32>
    %60 = vector.shape_cast %57 : vector<2x128xf32> to vector<1x1x2x128xf32>
    tpu.vector_store %arg7[%c0_17, %c0_18, %c0_19, %c0_20], %60 {strides = array<i32>} : memref<1x1x2x128xf32, #tpu.memory_space<vmem>>, vector<1x1x2x128xf32>,
    %61 = vector.shape_cast %51 : vector<128x128xf32> to vector<8x16x128xf32>
    %cst_21 = arith.constant 0.000000e+00 : f32
    %62 = vector.broadcast %cst_21 : f32 to vector<8x1x128xf32>
    %63 = tpu.concatenate %62, %61, %62 in 1 : vector<8x1x128xf32>, vector<8x16x128xf32>, vector<8x1x128xf32> -> vector<8x18x128xf32>
    %64 = arith.truncf %63 : vector<8x18x128xf32> to vector<8x18x128xbf16>
    %c0_22 = arith.constant 0 : index
    %c0_23 = arith.constant 0 : index
    %c0_24 = arith.constant 0 : index
    %c0_25 = arith.constant 0 : index
    %65 = vector.load %arg6[%c0_22, %c0_23, %c0_24, %c0_25] : memref<1x8x18x128xbf16, #tpu.memory_space<vmem>>, vector<1x8x18x128xbf16>
    %66 = vector.shape_cast %65 : vector<1x8x18x128xbf16> to vector<8x18x128xbf16>
    %67 = vector.shape_cast %64 : vector<8x18x128xbf16> to vector<1x8x18x128xbf16>
    tpu.vector_store %arg6[%c0_22, %c0_23, %c0_24, %c0_25], %67 {strides = array<i32>} : memref<1x8x18x128xbf16, #tpu.memory_space<vmem>>, vector<1x8x18x128xbf16>,
    return
  }
  func.func @transform_0(%arg0: i32, %arg1: i32) -> (i32, i32, i32, i32) {
    %c0_i32 = arith.constant 0 : i32
    %c0_i32_0 = arith.constant 0 : i32
    %c0_i32_1 = arith.constant 0 : i32
    %c0_i32_2 = arith.constant 0 : i32
    return %arg0, %c0_i32, %c0_i32_0, %c0_i32_1 : i32, i32, i32, i32
  }
  func.func @transform_1(%arg0: i32, %arg1: i32) -> (i32, i32) {
    %c0_i32 = arith.constant 0 : i32
    %c0_i32_0 = arith.constant 0 : i32
    %c0_i32_1 = arith.constant 0 : i32
    return %c0_i32, %c0_i32_0 : i32, i32
  }
  func.func @transform_2(%arg0: i32, %arg1: i32) -> (i32, i32, i32) {
    %c0_i32 = arith.constant 0 : i32
    %c0_i32_0 = arith.constant 0 : i32
    %c0_i32_1 = arith.constant 0 : i32
    %c0_i32_2 = arith.constant 0 : i32
    return %c0_i32, %c0_i32_0, %c0_i32_1 : i32, i32, i32
  }
  func.func @transform_3(%arg0: i32, %arg1: i32) -> (i32, i32, i32) {
    %c0_i32 = arith.constant 0 : i32
    %c0_i32_0 = arith.constant 0 : i32
    %c0_i32_1 = arith.constant 0 : i32
    %c0_i32_2 = arith.constant 0 : i32
    return %c0_i32, %c0_i32_0, %c0_i32_1 : i32, i32, i32
  }
  func.func @transform_4(%arg0: i32, %arg1: i32) -> (i32, i32, i32, i32) {
    %c0_i32 = arith.constant 0 : i32
    %c0_i32_0 = arith.constant 0 : i32
    %c0_i32_1 = arith.constant 0 : i32
    return %arg0, %arg1, %c0_i32, %c0_i32_0 : i32, i32, i32, i32
  }
  func.func @transform_5(%arg0: i32, %arg1: i32) -> (i32, i32, i32, i32) {
    %c0_i32 = arith.constant 0 : i32
    %c0_i32_0 = arith.constant 0 : i32
    %c0_i32_1 = arith.constant 0 : i32
    return %arg0, %arg1, %c0_i32, %c0_i32_0 : i32, i32, i32, i32
  }
}

</mosaic_0001>

<llo_original>
// kernel: tpu_custom_call.1
$region0: #{tpu_custom_call.1}
  #allocation0 [shape = 'u32[]', space=smem, size = 0x4, offset = 0x4, fixed_abs, tag = 'smem constant byte address 0x4 - core index']
  #allocation1 [shape = 'u32[144,128]{1,0:T(1,128)}', space=vmem, size = 0x12000, scoped, tag = 'internal scratch']
  %s0 = inlined_call_operand.vmem [shape: bf16[2,16,18,128], index: 0, kind: input, shape index: {}]
  %s1 = inlined_call_operand.vmem [shape: bf16[1152,128], index: 1, kind: input, shape index: {}]
  %s2 = inlined_call_operand.vmem [shape: f32[1,1,128], index: 2, kind: input, shape index: {}]
  %s3 = inlined_call_operand.vmem [shape: f32[1,1,128], index: 3, kind: input, shape index: {}]
  %s4 = inlined_call_operand.vmem [shape: bf16[2,16,18,128], index: 4, kind: output, shape index: {0}]
  %s5 = inlined_call_operand.hbm [shape: f32[2,2,2,128], index: 5, kind: output, shape index: {1}]
  %6 = xla_tuple %s4, %s5
  %s7 = sld [smem:[#allocation0]]
  $region57: #{tpu_custom_call.1} parent=0
    _
  %s9 = ssub.s32 1, %s7
  %s10 = scalar_select 0, %s9, %s7
  $region1: #{tpu_custom_call.1} parent=0
    #allocation2 [shape = 'u8[2048]{0}', space=vmem, size = 0x800, scoped, tag = 'output window, operand 1']
    #allocation3 [shape = 's32[2]{0}', space=sflag, size = 0x8, scoped, tag = 'scoped memory for tpu_custom_call.1']
    %11 = vsyncpa [#allocation3], 0
    %s12 = scalar_lea.sflag [#allocation3], 1
    %13 = vsyncpa %s12, 0
    loop: start=0, step=1, limit=6
    $region2: #{tpu_custom_call.1} parent=1 // loop_pre_header
      _
    $region3: #{tpu_custom_call.1} parent=1 // loop_header
      %s15 = sphi 0, %s19
      %p16 = scmp.ge.s32.totalorder %s15, 6
      %s22 = sphi 0, %s34
      %s23 = sphi 0, %s30
      %s24 = sphi 0, %s22
      %s25 = sphi 0, %s23
      %s26 = sphi 0, %s24
      %s27 = sphi 0, %s25
      %s37 = sphi 0, %s39
      %s40 = sphi 0, %s37
      %s41 = sphi 0, %s40
      %s57 = sphi 0, %s41
      %s61 = sphi 0, %s61
      %s63 = sphi 0, %s61
      %s64 = sphi 0, %s63
      %s78 = sphi 0, %s64
      %s82 = sphi 0, %s82
      %s84 = sphi 0, %s82
      %s85 = sphi 0, %s84
      %s99 = sphi 0, %s85
      %s103 = sphi 0, %s103
      %s105 = sphi 0, %s103
      %s106 = sphi 0, %s105
      %s120 = sphi 0, %s106
      %s128 = sphi 0, %s130
      %s131 = sphi 0, %s128
      %s132 = sphi 0, %s131
      %s148 = sphi 0, %s132
      %s156 = sphi 0, %s158
      %s159 = sphi 0, %s156
      %s160 = sphi 0, %s159
      %s176 = sphi 0, %s160
    $region4: #{tpu_custom_call.1} parent=1 // loop_header_branch
      %18 = sbr.rel (%p16) target = $region8
    $region5: #{tpu_custom_call.1} parent=1 // loop_body
      %s20 = ssub.s32 %s15, 1
      %s21 = ssub.s32 %s15, 2
      %s28 = sadd.s32 1, %s23
      %p29 = scmp.ge.s32.totalorder %s28, 2
      %s30 = scalar_select %p29, 0, %s28
      %s31 = sadd.s32 1, %s22
      %s32 = scalar_select %p29, %s31, %s22
      %p33 = scmp.ge.s32.totalorder %s32, 2
      %s34 = scalar_select %p33, 0, %s32
      %s35 = ssub.s32 %s22, %s34
      %p36 = scmp.eq.s32.totalorder %s35, 0
      %s38 = sadd.s32 %s37, 1
      %s39 = scalar_select %p36, %s37, %s38
      %p42 = pneg %p36
      %p43 = scmp.eq.s32.totalorder %s15, 3
      %p44 = por %p42, %p43
      %p45 = scmp.ne.s32.totalorder %s37, %s40
      %p46 = scmp.eq.s32.totalorder %s15, 0
      %p47 = por %p45, %p46
      %p48 = scmp.ne.s32.totalorder %s37, %s40
      %p49 = scmp.eq.s32.totalorder %s20, 3
      %p50 = por %p48, %p49
      %p51 = scmp.ne.s32.totalorder %s40, %s41
      %p52 = scmp.eq.s32.totalorder %s20, 0
      %p53 = por %p51, %p52
      %p54 = scmp.ne.s32.totalorder %s40, %s41
      %p55 = scmp.eq.s32.totalorder %s21, 3
      %p56 = por %p54, %p55
      %p58 = scmp.ne.s32.totalorder %s41, %s57
      %p59 = scmp.eq.s32.totalorder %s21, 0
      %p60 = por %p58, %p59
      %s62 = sadd.s32 %s61, 1
      %p65 = scmp.eq.s32.totalorder %s15, 3
      %p66 = scmp.ne.s32.totalorder %s61, %s63
      %p67 = scmp.eq.s32.totalorder %s15, 0
      %p68 = por %p66, %p67
      %p69 = scmp.ne.s32.totalorder %s61, %s63
      %p70 = scmp.eq.s32.totalorder %s20, 3
      %p71 = por %p69, %p70
      %p72 = scmp.ne.s32.totalorder %s63, %s64
      %p73 = scmp.eq.s32.totalorder %s20, 0
      %p74 = por %p72, %p73
      %p75 = scmp.ne.s32.totalorder %s63, %s64
      %p76 = scmp.eq.s32.totalorder %s21, 3
      %p77 = por %p75, %p76
      %p79 = scmp.ne.s32.totalorder %s64, %s78
      %p80 = scmp.eq.s32.totalorder %s21, 0
      %p81 = por %p79, %p80
      %s83 = sadd.s32 %s82, 1
      %p86 = scmp.eq.s32.totalorder %s15, 3
      %p87 = scmp.ne.s32.totalorder %s82, %s84
      %p88 = scmp.eq.s32.totalorder %s15, 0
      %p89 = por %p87, %p88
      %p90 = scmp.ne.s32.totalorder %s82, %s84
      %p91 = scmp.eq.s32.totalorder %s20, 3
      %p92 = por %p90, %p91
      %p93 = scmp.ne.s32.totalorder %s84, %s85
      %p94 = scmp.eq.s32.totalorder %s20, 0
      %p95 = por %p93, %p94
      %p96 = scmp.ne.s32.totalorder %s84, %s85
      %p97 = scmp.eq.s32.totalorder %s21, 3
      %p98 = por %p96, %p97
      %p100 = scmp.ne.s32.totalorder %s85, %s99
      %p101 = scmp.eq.s32.totalorder %s21, 0
      %p102 = por %p100, %p101
      %s104 = sadd.s32 %s103, 1
      %p107 = scmp.eq.s32.totalorder %s15, 3
      %p108 = scmp.ne.s32.totalorder %s103, %s105
      %p109 = scmp.eq.s32.totalorder %s15, 0
      %p110 = por %p108, %p109
      %p111 = scmp.ne.s32.totalorder %s103, %s105
      %p112 = scmp.eq.s32.totalorder %s20, 3
      %p113 = por %p111, %p112
      %p114 = scmp.ne.s32.totalorder %s105, %s106
      %p115 = scmp.eq.s32.totalorder %s20, 0
      %p116 = por %p114, %p115
      %p117 = scmp.ne.s32.totalorder %s105, %s106
      %p118 = scmp.eq.s32.totalorder %s21, 3
      %p119 = por %p117, %p118
      %p121 = scmp.ne.s32.totalorder %s106, %s120
      %p122 = scmp.eq.s32.totalorder %s21, 0
      %p123 = por %p121, %p122
      %s124 = ssub.s32 %s22, %s34
      %s125 = ssub.s32 %s23, %s30
      %s126 = sor.u32 %s124, %s125
      %p127 = scmp.eq.s32.totalorder %s126, 0
      %s129 = sadd.s32 %s128, 1
      %s130 = scalar_select %p127, %s128, %s129
      %p133 = pneg %p127
      %p134 = scmp.eq.s32.totalorder %s15, 3
      %p135 = por %p133, %p134
      %p136 = scmp.ne.s32.totalorder %s128, %s131
      %p137 = scmp.eq.s32.totalorder %s15, 0
      %p138 = por %p136, %p137
      %p139 = scmp.ne.s32.totalorder %s128, %s131
      %p140 = scmp.eq.s32.totalorder %s20, 3
      %p141 = por %p139, %p140
      %p142 = scmp.ne.s32.totalorder %s131, %s132
      %p143 = scmp.eq.s32.totalorder %s20, 0
      %p144 = por %p142, %p143
      %p145 = scmp.ne.s32.totalorder %s131, %s132
      %p146 = scmp.eq.s32.totalorder %s21, 3
      %p147 = por %p145, %p146
      %p149 = scmp.ne.s32.totalorder %s132, %s148
      %p150 = scmp.eq.s32.totalorder %s21, 0
      %p151 = por %p149, %p150
      %s152 = ssub.s32 %s22, %s34
      %s153 = ssub.s32 %s23, %s30
      %s154 = sor.u32 %s152, %s153
      %p155 = scmp.eq.s32.totalorder %s154, 0
      %s157 = sadd.s32 %s156, 1
      %s158 = scalar_select %p155, %s156, %s157
      %p161 = pneg %p155
      %p162 = scmp.eq.s32.totalorder %s15, 3
      %p163 = por %p161, %p162
      %p164 = scmp.ne.s32.totalorder %s156, %s159
      %p165 = scmp.eq.s32.totalorder %s15, 0
      %p166 = por %p164, %p165
      %p167 = scmp.ne.s32.totalorder %s156, %s159
      %p168 = scmp.eq.s32.totalorder %s20, 3
      %p169 = por %p167, %p168
      %p170 = scmp.ne.s32.totalorder %s159, %s160
      %p171 = scmp.eq.s32.totalorder %s20, 0
      %p172 = por %p170, %p171
      %p173 = scmp.ne.s32.totalorder %s159, %s160
      %p174 = scmp.eq.s32.totalorder %s21, 3
      %p175 = por %p173, %p174
      %p177 = scmp.ne.s32.totalorder %s160, %s176
      %p178 = scmp.eq.s32.totalorder %s21, 0
      %p179 = por %p177, %p178
      %p180 = scmp.le.s32.totalorder 1, %s15
      %p181 = scmp.lt.s32.totalorder %s15, 5
      %p182 = pnand %p180, %p181
      %p183 = pneg %p182
      // Predicated region
      $region9: #{tpu_custom_call.1} parent=5 // pred_check
        _
      $region10: #{tpu_custom_call.1} parent=5 // pred_check_branch
        %185 = sbr.rel (%p182) target = $region12
      $region11: #{tpu_custom_call.1} parent=5 // pred_region
        %s186 = ssub.s32 %s15, 1
        // Predicated region
        $region13: #{tpu_custom_call.1} parent=11 // pred_check
          %p187 = pneg %p74
        $region14: #{tpu_custom_call.1} parent=11 // pred_check_branch
          %189 = sbr.rel (%p187) target = $region16
        $region15: #{tpu_custom_call.1} parent=11 // pred_region
          _
        $region16: #{tpu_custom_call.1} parent=11 // pred_fallthru
          _
        // Predicated region
        $region17: #{tpu_custom_call.1} parent=11 // pred_check
          %p190 = pneg %p95
        $region18: #{tpu_custom_call.1} parent=11 // pred_check_branch
          %192 = sbr.rel (%p190) target = $region20
        $region19: #{tpu_custom_call.1} parent=11 // pred_region
          _
        $region20: #{tpu_custom_call.1} parent=11 // pred_fallthru
          _
        // Predicated region
        $region21: #{tpu_custom_call.1} parent=11 // pred_check
          %p193 = pneg %p116
        $region22: #{tpu_custom_call.1} parent=11 // pred_check_branch
          %195 = sbr.rel (%p193) target = $region24
        $region23: #{tpu_custom_call.1} parent=11 // pred_region
          _
        $region24: #{tpu_custom_call.1} parent=11 // pred_fallthru
          _
      $region12: #{tpu_custom_call.1} parent=5 // pred_fallthru
        _
      %p196 = scmp.lt.s32.totalorder %s15, 4
      // Predicated region
      $region25: #{tpu_custom_call.1} parent=5 // pred_check
        %p197 = pneg %p196
      $region26: #{tpu_custom_call.1} parent=5 // pred_check_branch
        %199 = sbr.rel (%p197) target = $region28
      $region27: #{tpu_custom_call.1} parent=5 // pred_region
        // Predicated region
        $region29: #{tpu_custom_call.1} parent=27 // pred_check
          %p200 = pneg %p47
        $region30: #{tpu_custom_call.1} parent=27 // pred_check_branch
          %202 = sbr.rel (%p200) target = $region32
        $region31: #{tpu_custom_call.1} parent=27 // pred_region
          %p203 = scmp.lt.s32.totalorder %s22, 1
          %s204 = scalar_select %p203, %s22, 1
          %s205 = smul.addr %s204, 48
          %s206 = smul.addr %s205, 4
          %s207 = scalar_lea.vmem %s0, %s206
        $region32: #{tpu_custom_call.1} parent=27 // pred_fallthru
          _
      $region28: #{tpu_custom_call.1} parent=5 // pred_fallthru
        _
      %p208 = scmp.le.s32.totalorder 1, %s15
      %p209 = scmp.lt.s32.totalorder %s15, 5
      %p210 = pnand %p208, %p209
      %p211 = pneg %p210
      // Predicated region
      $region33: #{tpu_custom_call.1} parent=5 // pred_check
        _
      $region34: #{tpu_custom_call.1} parent=5 // pred_check_branch
        %213 = sbr.rel (%p210) target = $region36
      $region35: #{tpu_custom_call.1} parent=5 // pred_region
        %s214 = ssub.s32 %s15, 1
        %p215 = scmp.lt.s32.totalorder %s24, 1
        %s216 = scalar_select %p215, %s24, 1
        %s217 = smul.addr %s216, 48
        %s218 = smul.addr %s217, 4
        %s219 = scalar_lea.vmem %s0, %s218
        %p220 = pneg %p53
        %p221 = pneg %p50
        %p222 = pneg %p74
        %p223 = pneg %p71
        %p224 = pneg %p95
        %p225 = pneg %p92
        %p226 = pneg %p116
        %p227 = pneg %p113
        %p228 = pneg %p144
        %p229 = pneg %p141
        %s230 = smul.u32 8, %s25
        %p231 = scmp.lt.s32.totalorder %s24, 1
        %s232 = scalar_select %p231, %s24, 1
        %p233 = scmp.lt.s32.totalorder %s230, 15
        %s234 = scalar_select %p233, %s230, 15
        %s235 = smul.addr %s234, 3
        %s236 = smul.addr %s232, 48
        %s237 = sadd.s32 %s235, %s236
        %s238 = smul.addr %s237, 4
        %s239 = scalar_lea.vmem %s4, %s238
        %p240 = pneg %p172
        %p241 = pneg %p169
        %s242 = sand.u32 %s159, 1
        %s243 = scalar_lea.sflag [#allocation3], %s242
        %s244 = sand.u32 %s159, 1
        %s245 = smul.addr %s244, 2
        %s246 = scalar_lea.vmem [#allocation2], %s245
        %p247 = scmp.lt.s32.totalorder %s24, 1
        %s248 = scalar_select %p247, %s24, 1
        %s249 = smul.addr %s248, 48
        %s250 = smul.addr %s249, 4
        %s251 = scalar_lea.vmem %s0, %s250
        %s252 = smul.u32 8, %s25
        %p253 = scmp.lt.s32.totalorder %s24, 1
        %s254 = scalar_select %p253, %s24, 1
        %p255 = scmp.lt.s32.totalorder %s252, 15
        %s256 = scalar_select %p255, %s252, 15
        %s257 = smul.addr %s256, 3
        %s258 = smul.addr %s254, 48
        %s259 = sadd.s32 %s257, %s258
        %s260 = smul.addr %s259, 4
        %s261 = scalar_lea.vmem %s4, %s260
        %s262 = smul.u32 8, %s25
        %s264 = smul.u32 %s25, 8
        %s265 = ssub.s32 %s264, 1
        %p266 = scmp.gt.s32.totalorder %s265, 0
        %s267 = scalar_select %p266, %s265, 0
        %s268 = smul.u32 %s267, 3
        %s269 = smul.addr %s268, 4
        %s270 = scalar_lea.vmem %s251, %s269
        %v271 = vld [vmem:[%s270] sm:$0xf]
        %v272 = vld [vmem:[%s270 + $0x4] sm:$0xf]
        %v273 = vld [vmem:[%s270 + $0x8] sm:$0x1]
        %s274 = smul.u32 %s264, 3
        %s275 = smul.addr %s274, 4
        %s276 = scalar_lea.vmem %s251, %s275
        %v277 = vld [vmem:[%s276] sm:$0xf]
        %v278 = vld [vmem:[%s276 + $0x4] sm:$0xf]
        %v279 = vld [vmem:[%s276 + $0x8] sm:$0x1]
        %v280 = vld [vmem:[%s276 + $0xc] sm:$0xf]
        %v281 = vld [vmem:[%s276 + $0x10] sm:$0xf]
        %v282 = vld [vmem:[%s276 + $0x14] sm:$0x1]
        %v283 = vld [vmem:[%s276 + $0x18] sm:$0xf]
        %v284 = vld [vmem:[%s276 + $0x1c] sm:$0xf]
        %v285 = vld [vmem:[%s276 + $0x20] sm:$0x1]
        %v286 = vld [vmem:[%s276 + $0x24] sm:$0xf]
        %v287 = vld [vmem:[%s276 + $0x28] sm:$0xf]
        %v288 = vld [vmem:[%s276 + $0x2c] sm:$0x1]
        %v289 = vld [vmem:[%s276 + $0x30] sm:$0xf]
        %v290 = vld [vmem:[%s276 + $0x34] sm:$0xf]
        %v291 = vld [vmem:[%s276 + $0x38] sm:$0x1]
        %v292 = vld [vmem:[%s276 + $0x3c] sm:$0xf]
        %v293 = vld [vmem:[%s276 + $0x40] sm:$0xf]
        %v294 = vld [vmem:[%s276 + $0x44] sm:$0x1]
        %v295 = vld [vmem:[%s276 + $0x48] sm:$0xf]
        %v296 = vld [vmem:[%s276 + $0x4c] sm:$0xf]
        %v297 = vld [vmem:[%s276 + $0x50] sm:$0x1]
        %v298 = vld [vmem:[%s276 + $0x54] sm:$0xf]
        %v299 = vld [vmem:[%s276 + $0x58] sm:$0xf]
        %v300 = vld [vmem:[%s276 + $0x5c] sm:$0x1]
        %s301 = sadd.s32 %s264, 8
        %p302 = scmp.lt.s32.totalorder %s301, 15
        %s303 = scalar_select %p302, %s301, 15
        %s304 = smul.u32 %s303, 3
        %s305 = smul.addr %s304, 4
        %s306 = scalar_lea.vmem %s251, %s305
        %v307 = vld [vmem:[%s306] sm:$0xf]
        %v308 = vld [vmem:[%s306 + $0x4] sm:$0xf]
        %v309 = vld [vmem:[%s306 + $0x8] sm:$0x1]
        %v310 = vstv %s265
        %v311 = vadd.s32 %v310, 1
        %v312 = vadd.s32 %v310, 2
        %v313 = vadd.s32 %v310, 3
        %v314 = vadd.s32 %v310, 4
        %v315 = vadd.s32 %v310, 5
        %v316 = vadd.s32 %v310, 6
        %v317 = vadd.s32 %v310, 7
        %v318 = vadd.s32 %v310, 8
        %v319 = vadd.s32 %v310, 9
        %v320 = vlaneseq
        %v321 = vshrl.u32 %v320, 7
        %v322 = vadd.s32 %v321, 8
        %v323 = vadd.s32 %v321, 16
        %vm324 = vcmp.ge.s32.totalorder %v310, 0
        %vm325 = vcmp.ge.s32.totalorder %v311, 0
        %vm326 = vcmp.ge.s32.totalorder %v312, 0
        %vm327 = vcmp.ge.s32.totalorder %v313, 0
        %vm328 = vcmp.ge.s32.totalorder %v314, 0
        %vm329 = vcmp.ge.s32.totalorder %v315, 0
        %vm330 = vcmp.ge.s32.totalorder %v316, 0
        %vm331 = vcmp.ge.s32.totalorder %v317, 0
        %vm332 = vcmp.ge.s32.totalorder %v318, 0
        %vm333 = vcmp.ge.s32.totalorder %v319, 0
        %vm334 = vcmp.lt.s32.totalorder %v310, 16
        %vm335 = vcmp.lt.s32.totalorder %v311, 16
        %vm336 = vcmp.lt.s32.totalorder %v312, 16
        %vm337 = vcmp.lt.s32.totalorder %v313, 16
        %vm338 = vcmp.lt.s32.totalorder %v314, 16
        %vm339 = vcmp.lt.s32.totalorder %v315, 16
        %vm340 = vcmp.lt.s32.totalorder %v316, 16
        %vm341 = vcmp.lt.s32.totalorder %v317, 16
        %vm342 = vcmp.lt.s32.totalorder %v318, 16
        %vm343 = vcmp.lt.s32.totalorder %v319, 16
        %vm344 = vmand %vm324, %vm334
        %vm345 = vmand %vm325, %vm335
        %vm346 = vmand %vm326, %vm336
        %vm347 = vmand %vm327, %vm337
        %vm348 = vmand %vm328, %vm338
        %vm349 = vmand %vm329, %vm339
        %vm350 = vmand %vm330, %vm340
        %vm351 = vmand %vm331, %vm341
        %vm352 = vmand %vm332, %vm342
        %vm353 = vmand %vm333, %vm343
        %vm354 = vcmp.ge.s32.totalorder %v321, 1
        %vm355 = vcmp.ge.s32.totalorder %v322, 1
        %vm356 = vcmp.ge.s32.totalorder %v323, 1
        %v357 = vsel %vm344, 1, 0
        %v358 = vsel %vm345, 1, 0
        %v359 = vsel %vm346, 1, 0
        %v360 = vsel %vm347, 1, 0
        %v361 = vsel %vm348, 1, 0
        %v362 = vsel %vm349, 1, 0
        %v363 = vsel %vm350, 1, 0
        %v364 = vsel %vm351, 1, 0
        %v365 = vsel %vm352, 1, 0
        %v366 = vsel %vm353, 1, 0
        %vm367 = vcmp.eq.s32.totalorder %v357, 1
        %vm368 = vcmp.eq.s32.totalorder %v358, 1
        %vm369 = vcmp.eq.s32.totalorder %v359, 1
        %vm370 = vcmp.eq.s32.totalorder %v360, 1
        %vm371 = vcmp.eq.s32.totalorder %v361, 1
        %vm372 = vcmp.eq.s32.totalorder %v362, 1
        %vm373 = vcmp.eq.s32.totalorder %v363, 1
        %vm374 = vcmp.eq.s32.totalorder %v364, 1
        %vm375 = vcmp.eq.s32.totalorder %v365, 1
        %vm376 = vcmp.eq.s32.totalorder %v366, 1
        %v377 = vsel %vm354, 1, 0
        %v378 = vsel %vm355, 1, 0
        %v379 = vsel %vm356, 1, 0
        %vm380 = vcmp.eq.s32.totalorder %v377, 1
        %vm381 = vcmp.eq.s32.totalorder %v378, 1
        %vm382 = vcmp.eq.s32.totalorder %v379, 1
        %vm383 = vmand %vm367, %vm380
        %vm384 = vmand %vm367, %vm381
        %vm385 = vmand %vm367, %vm382
        %vm386 = vmand %vm368, %vm380
        %vm387 = vmand %vm368, %vm381
        %vm388 = vmand %vm368, %vm382
        %vm389 = vmand %vm369, %vm380
        %vm390 = vmand %vm369, %vm381
        %vm391 = vmand %vm369, %vm382
        %vm392 = vmand %vm370, %vm380
        %vm393 = vmand %vm370, %vm381
        %vm394 = vmand %vm370, %vm382
        %vm395 = vmand %vm371, %vm380
        %vm396 = vmand %vm371, %vm381
        %vm397 = vmand %vm371, %vm382
        %vm398 = vmand %vm372, %vm380
        %vm399 = vmand %vm372, %vm381
        %vm400 = vmand %vm372, %vm382
        %vm401 = vmand %vm373, %vm380
        %vm402 = vmand %vm373, %vm381
        %vm403 = vmand %vm373, %vm382
        %vm404 = vmand %vm374, %vm380
        %vm405 = vmand %vm374, %vm381
        %vm406 = vmand %vm374, %vm382
        %vm407 = vmand %vm375, %vm380
        %vm408 = vmand %vm375, %vm381
        %vm409 = vmand %vm375, %vm382
        %vm410 = vmand %vm376, %vm380
        %vm411 = vmand %vm376, %vm381
        %vm412 = vmand %vm376, %vm382
        %vm413 = vcmp.le.s32.totalorder %v321, 16
        %vm414 = vcmp.le.s32.totalorder %v322, 16
        %vm415 = vcmp.le.s32.totalorder %v323, 16
        %v416 = vsel %vm413, 1, 0
        %v417 = vsel %vm414, 1, 0
        %v418 = vsel %vm415, 1, 0
        %vm419 = vcmp.eq.s32.totalorder %v416, 1
        %vm420 = vcmp.eq.s32.totalorder %v417, 1
        %vm421 = vcmp.eq.s32.totalorder %v418, 1
        %vm422 = vmand %vm383, %vm419
        %vm423 = vmand %vm384, %vm420
        %vm424 = vmand %vm385, %vm421
        %vm425 = vmand %vm386, %vm419
        %vm426 = vmand %vm387, %vm420
        %vm427 = vmand %vm388, %vm421
        %vm428 = vmand %vm389, %vm419
        %vm429 = vmand %vm390, %vm420
        %vm430 = vmand %vm391, %vm421
        %vm431 = vmand %vm392, %vm419
        %vm432 = vmand %vm393, %vm420
        %vm433 = vmand %vm394, %vm421
        %vm434 = vmand %vm395, %vm419
        %vm435 = vmand %vm396, %vm420
        %vm436 = vmand %vm397, %vm421
        %vm437 = vmand %vm398, %vm419
        %vm438 = vmand %vm399, %vm420
        %vm439 = vmand %vm400, %vm421
        %vm440 = vmand %vm401, %vm419
        %vm441 = vmand %vm402, %vm420
        %vm442 = vmand %vm403, %vm421
        %vm443 = vmand %vm404, %vm419
        %vm444 = vmand %vm405, %vm420
        %vm445 = vmand %vm406, %vm421
        %vm446 = vmand %vm407, %vm419
        %vm447 = vmand %vm408, %vm420
        %vm448 = vmand %vm409, %vm421
        %vm449 = vmand %vm410, %vm419
        %vm450 = vmand %vm411, %vm420
        %vm451 = vmand %vm412, %vm421
        %v452 = vsel %vm422, 1, 0
        %v453 = vsel %vm423, 1, 0
        %v454 = vsel %vm424, 1, 0
        %v455 = vsel %vm425, 1, 0
        %v456 = vsel %vm426, 1, 0
        %v457 = vsel %vm427, 1, 0
        %v458 = vsel %vm428, 1, 0
        %v459 = vsel %vm429, 1, 0
        %v460 = vsel %vm430, 1, 0
        %v461 = vsel %vm431, 1, 0
        %v462 = vsel %vm432, 1, 0
        %v463 = vsel %vm433, 1, 0
        %v464 = vsel %vm434, 1, 0
        %v465 = vsel %vm435, 1, 0
        %v466 = vsel %vm436, 1, 0
        %v467 = vsel %vm437, 1, 0
        %v468 = vsel %vm438, 1, 0
        %v469 = vsel %vm439, 1, 0
        %v470 = vsel %vm440, 1, 0
        %v471 = vsel %vm441, 1, 0
        %v472 = vsel %vm442, 1, 0
        %v473 = vsel %vm443, 1, 0
        %v474 = vsel %vm444, 1, 0
        %v475 = vsel %vm445, 1, 0
        %v476 = vsel %vm446, 1, 0
        %v477 = vsel %vm447, 1, 0
        %v478 = vsel %vm448, 1, 0
        %v479 = vsel %vm449, 1, 0
        %v480 = vsel %vm450, 1, 0
        %v481 = vsel %vm451, 1, 0
        %v482 = vcvt.s32.f32 %v452
        %v483 = vcvt.s32.f32 %v453
        %v484 = vcvt.s32.f32 %v454
        %v485 = vcvt.s32.f32 %v455
        %v486 = vcvt.s32.f32 %v456
        %v487 = vcvt.s32.f32 %v457
        %v488 = vcvt.s32.f32 %v458
        %v489 = vcvt.s32.f32 %v459
        %v490 = vcvt.s32.f32 %v460
        %v491 = vcvt.s32.f32 %v461
        %v492 = vcvt.s32.f32 %v462
        %v493 = vcvt.s32.f32 %v463
        %v494 = vcvt.s32.f32 %v464
        %v495 = vcvt.s32.f32 %v465
        %v496 = vcvt.s32.f32 %v466
        %v497 = vcvt.s32.f32 %v467
        %v498 = vcvt.s32.f32 %v468
        %v499 = vcvt.s32.f32 %v469
        %v500 = vcvt.s32.f32 %v470
        %v501 = vcvt.s32.f32 %v471
        %v502 = vcvt.s32.f32 %v472
        %v503 = vcvt.s32.f32 %v473
        %v504 = vcvt.s32.f32 %v474
        %v505 = vcvt.s32.f32 %v475
        %v506 = vcvt.s32.f32 %v476
        %v507 = vcvt.s32.f32 %v477
        %v508 = vcvt.s32.f32 %v478
        %v509 = vcvt.s32.f32 %v479
        %v510 = vcvt.s32.f32 %v480
        %v511 = vcvt.s32.f32 %v481
        %v512 = vpack.c.bf16 %v483, %v482
        %v513 = vpack.c.bf16 %v484, %v484
        %v514 = vpack.c.bf16 %v486, %v485
        %v515 = vpack.c.bf16 %v487, %v487
        %v516 = vpack.c.bf16 %v489, %v488
        %v517 = vpack.c.bf16 %v490, %v490
        %v518 = vpack.c.bf16 %v492, %v491
        %v519 = vpack.c.bf16 %v493, %v493
        %v520 = vpack.c.bf16 %v495, %v494
        %v521 = vpack.c.bf16 %v496, %v496
        %v522 = vpack.c.bf16 %v498, %v497
        %v523 = vpack.c.bf16 %v499, %v499
        %v524 = vpack.c.bf16 %v501, %v500
        %v525 = vpack.c.bf16 %v502, %v502
        %v526 = vpack.c.bf16 %v504, %v503
        %v527 = vpack.c.bf16 %v505, %v505
        %v528 = vpack.c.bf16 %v507, %v506
        %v529 = vpack.c.bf16 %v508, %v508
        %v530 = vpack.c.bf16 %v510, %v509
        %v531 = vpack.c.bf16 %v511, %v511
        %v553 = vunpack.c.l.s4 839922192
        %v554 = vunpack.c.0.s8 %v553
        %v555 = vlaneseq
        %v556 = vshrl.u32 %v555, 7
        %v557 = vsub.s32 %v554, %v556
        %v558 = vrot.slane %v512, %v557
        %v560 = vunpack.c.l.s4 1985246804
        %v561 = vunpack.c.0.s8 %v560
        %v562 = vlaneseq
        %v563 = vshrl.u32 %v562, 7
        %v564 = vsub.s32 %v561, %v563
        %v565 = vrot.slane %v512, %v564
        %v567 = vunpack.c.l.s4 839922192
        %v568 = vunpack.c.0.s8 %v567
        %v569 = vlaneseq
        %v570 = vshrl.u32 %v569, 7
        %v571 = vsub.s32 %v568, %v570
        %v572 = vrot.slane %v513, %v571
        %v574 = vunpack.c.l.s4 839922192
        %v575 = vunpack.c.0.s8 %v574
        %v576 = vlaneseq
        %v577 = vshrl.u32 %v576, 7
        %v578 = vsub.s32 %v575, %v577
        %v579 = vrot.slane %v514, %v578
        %v581 = vunpack.c.l.s4 1985246804
        %v582 = vunpack.c.0.s8 %v581
        %v583 = vlaneseq
        %v584 = vshrl.u32 %v583, 7
        %v585 = vsub.s32 %v582, %v584
        %v586 = vrot.slane %v514, %v585
        %v588 = vunpack.c.l.s4 839922192
        %v589 = vunpack.c.0.s8 %v588
        %v590 = vlaneseq
        %v591 = vshrl.u32 %v590, 7
        %v592 = vsub.s32 %v589, %v591
        %v593 = vrot.slane %v515, %v592
        %v595 = vunpack.c.l.s4 839922192
        %v596 = vunpack.c.0.s8 %v595
        %v597 = vlaneseq
        %v598 = vshrl.u32 %v597, 7
        %v599 = vsub.s32 %v596, %v598
        %v600 = vrot.slane %v516, %v599
        %v602 = vunpack.c.l.s4 1985246804
        %v603 = vunpack.c.0.s8 %v602
        %v604 = vlaneseq
        %v605 = vshrl.u32 %v604, 7
        %v606 = vsub.s32 %v603, %v605
        %v607 = vrot.slane %v516, %v606
        %v609 = vunpack.c.l.s4 839922192
        %v610 = vunpack.c.0.s8 %v609
        %v611 = vlaneseq
        %v612 = vshrl.u32 %v611, 7
        %v613 = vsub.s32 %v610, %v612
        %v614 = vrot.slane %v517, %v613
        %v616 = vunpack.c.l.s4 839922192
        %v617 = vunpack.c.0.s8 %v616
        %v618 = vlaneseq
        %v619 = vshrl.u32 %v618, 7
        %v620 = vsub.s32 %v617, %v619
        %v621 = vrot.slane %v518, %v620
        %v623 = vunpack.c.l.s4 1985246804
        %v624 = vunpack.c.0.s8 %v623
        %v625 = vlaneseq
        %v626 = vshrl.u32 %v625, 7
        %v627 = vsub.s32 %v624, %v626
        %v628 = vrot.slane %v518, %v627
        %v630 = vunpack.c.l.s4 839922192
        %v631 = vunpack.c.0.s8 %v630
        %v632 = vlaneseq
        %v633 = vshrl.u32 %v632, 7
        %v634 = vsub.s32 %v631, %v633
        %v635 = vrot.slane %v519, %v634
        %v637 = vunpack.c.l.s4 839922192
        %v638 = vunpack.c.0.s8 %v637
        %v639 = vlaneseq
        %v640 = vshrl.u32 %v639, 7
        %v641 = vsub.s32 %v638, %v640
        %v642 = vrot.slane %v520, %v641
        %v644 = vunpack.c.l.s4 1985246804
        %v645 = vunpack.c.0.s8 %v644
        %v646 = vlaneseq
        %v647 = vshrl.u32 %v646, 7
        %v648 = vsub.s32 %v645, %v647
        %v649 = vrot.slane %v520, %v648
        %v651 = vunpack.c.l.s4 839922192
        %v652 = vunpack.c.0.s8 %v651
        %v653 = vlaneseq
        %v654 = vshrl.u32 %v653, 7
        %v655 = vsub.s32 %v652, %v654
        %v656 = vrot.slane %v521, %v655
        %v658 = vunpack.c.l.s4 839922192
        %v659 = vunpack.c.0.s8 %v658
        %v660 = vlaneseq
        %v661 = vshrl.u32 %v660, 7
        %v662 = vsub.s32 %v659, %v661
        %v663 = vrot.slane %v522, %v662
        %v665 = vunpack.c.l.s4 1985246804
        %v666 = vunpack.c.0.s8 %v665
        %v667 = vlaneseq
        %v668 = vshrl.u32 %v667, 7
        %v669 = vsub.s32 %v666, %v668
        %v670 = vrot.slane %v522, %v669
        %v672 = vunpack.c.l.s4 839922192
        %v673 = vunpack.c.0.s8 %v672
        %v674 = vlaneseq
        %v675 = vshrl.u32 %v674, 7
        %v676 = vsub.s32 %v673, %v675
        %v677 = vrot.slane %v523, %v676
        %v679 = vunpack.c.l.s4 839922192
        %v680 = vunpack.c.0.s8 %v679
        %v681 = vlaneseq
        %v682 = vshrl.u32 %v681, 7
        %v683 = vsub.s32 %v680, %v682
        %v684 = vrot.slane %v524, %v683
        %v686 = vunpack.c.l.s4 1985246804
        %v687 = vunpack.c.0.s8 %v686
        %v688 = vlaneseq
        %v689 = vshrl.u32 %v688, 7
        %v690 = vsub.s32 %v687, %v689
        %v691 = vrot.slane %v524, %v690
        %v693 = vunpack.c.l.s4 839922192
        %v694 = vunpack.c.0.s8 %v693
        %v695 = vlaneseq
        %v696 = vshrl.u32 %v695, 7
        %v697 = vsub.s32 %v694, %v696
        %v698 = vrot.slane %v525, %v697
        %v700 = vunpack.c.l.s4 839922192
        %v701 = vunpack.c.0.s8 %v700
        %v702 = vlaneseq
        %v703 = vshrl.u32 %v702, 7
        %v704 = vsub.s32 %v701, %v703
        %v705 = vrot.slane %v526, %v704
        %v707 = vunpack.c.l.s4 1985246804
        %v708 = vunpack.c.0.s8 %v707
        %v709 = vlaneseq
        %v710 = vshrl.u32 %v709, 7
        %v711 = vsub.s32 %v708, %v710
        %v712 = vrot.slane %v526, %v711
        %v714 = vunpack.c.l.s4 839922192
        %v715 = vunpack.c.0.s8 %v714
        %v716 = vlaneseq
        %v717 = vshrl.u32 %v716, 7
        %v718 = vsub.s32 %v715, %v717
        %v719 = vrot.slane %v527, %v718
        %v721 = vunpack.c.l.s4 839922192
        %v722 = vunpack.c.0.s8 %v721
        %v723 = vlaneseq
        %v724 = vshrl.u32 %v723, 7
        %v725 = vsub.s32 %v722, %v724
        %v726 = vrot.slane %v528, %v725
        %v728 = vunpack.c.l.s4 1985246804
        %v729 = vunpack.c.0.s8 %v728
        %v730 = vlaneseq
        %v731 = vshrl.u32 %v730, 7
        %v732 = vsub.s32 %v729, %v731
        %v733 = vrot.slane %v528, %v732
        %v735 = vunpack.c.l.s4 839922192
        %v736 = vunpack.c.0.s8 %v735
        %v737 = vlaneseq
        %v738 = vshrl.u32 %v737, 7
        %v739 = vsub.s32 %v736, %v738
        %v740 = vrot.slane %v529, %v739
        %v742 = vunpack.c.l.s4 839922192
        %v743 = vunpack.c.0.s8 %v742
        %v744 = vlaneseq
        %v745 = vshrl.u32 %v744, 7
        %v746 = vsub.s32 %v743, %v745
        %v747 = vrot.slane %v530, %v746
        %v749 = vunpack.c.l.s4 1985246804
        %v750 = vunpack.c.0.s8 %v749
        %v751 = vlaneseq
        %v752 = vshrl.u32 %v751, 7
        %v753 = vsub.s32 %v750, %v752
        %v754 = vrot.slane %v530, %v753
        %v756 = vunpack.c.l.s4 839922192
        %v757 = vunpack.c.0.s8 %v756
        %v758 = vlaneseq
        %v759 = vshrl.u32 %v758, 7
        %v760 = vsub.s32 %v757, %v759
        %v761 = vrot.slane %v531, %v760
        %v792 = vmul.bf16 %v271, %v558
        %v793 = vmul.bf16 %v272, %v565
        %v794 = vmul.bf16 %v273, %v572
        %v795 = vmul.bf16 %v277, %v579
        %v796 = vmul.bf16 %v278, %v586
        %v797 = vmul.bf16 %v279, %v593
        %v798 = vmul.bf16 %v280, %v600
        %v799 = vmul.bf16 %v281, %v607
        %v800 = vmul.bf16 %v282, %v614
        %v801 = vmul.bf16 %v283, %v621
        %v802 = vmul.bf16 %v284, %v628
        %v803 = vmul.bf16 %v285, %v635
        %v804 = vmul.bf16 %v286, %v642
        %v805 = vmul.bf16 %v287, %v649
        %v806 = vmul.bf16 %v288, %v656
        %v807 = vmul.bf16 %v289, %v663
        %v808 = vmul.bf16 %v290, %v670
        %v809 = vmul.bf16 %v291, %v677
        %v810 = vmul.bf16 %v292, %v684
        %v811 = vmul.bf16 %v293, %v691
        %v812 = vmul.bf16 %v294, %v698
        %v813 = vmul.bf16 %v295, %v705
        %v814 = vmul.bf16 %v296, %v712
        %v815 = vmul.bf16 %v297, %v719
        %v816 = vmul.bf16 %v298, %v726
        %v817 = vmul.bf16 %v299, %v733
        %v818 = vmul.bf16 %v300, %v740
        %v819 = vmul.bf16 %v307, %v747
        %v820 = vmul.bf16 %v308, %v754
        %v821 = vmul.bf16 %v309, %v761
        %v838 = vunpack.c.l.b16 %v792
        %v839 = vunpack.c.l.b16 %v793
        %v840 = vunpack.c.l.b16 %v795
        %v841 = vunpack.c.l.b16 %v796
        %v842 = vunpack.c.l.b16 %v798
        %v843 = vunpack.c.l.b16 %v799
        %v844 = vunpack.c.l.b16 %v801
        %v845 = vunpack.c.l.b16 %v802
        %v846 = vunpack.c.l.b16 %v804
        %v847 = vunpack.c.l.b16 %v805
        %v848 = vunpack.c.l.b16 %v807
        %v849 = vunpack.c.l.b16 %v808
        %v850 = vunpack.c.l.b16 %v810
        %v851 = vunpack.c.l.b16 %v811
        %v852 = vunpack.c.l.b16 %v813
        %v853 = vunpack.c.l.b16 %v814
        %v854 = vpack.c.b16 %v839, %v838
        %v855 = vpack.c.b16 %v841, %v840
        %v856 = vpack.c.b16 %v843, %v842
        %v857 = vpack.c.b16 %v845, %v844
        %v858 = vpack.c.b16 %v847, %v846
        %v859 = vpack.c.b16 %v849, %v848
        %v860 = vpack.c.b16 %v851, %v850
        %v861 = vpack.c.b16 %v853, %v852
        %v878 = vunpack.c.l.b16 %v794
        %v879 = vunpack.c.l.b16 %v797
        %v880 = vunpack.c.l.b16 %v800
        %v881 = vunpack.c.l.b16 %v803
        %v882 = vunpack.c.l.b16 %v806
        %v883 = vunpack.c.l.b16 %v809
        %v884 = vunpack.c.l.b16 %v812
        %v885 = vunpack.c.l.b16 %v815
        %v886 = vpack.c.b16 %v878, %v878
        %v887 = vpack.c.b16 %v879, %v879
        %v888 = vpack.c.b16 %v880, %v880
        %v889 = vpack.c.b16 %v881, %v881
        %v890 = vpack.c.b16 %v882, %v882
        %v891 = vpack.c.b16 %v883, %v883
        %v892 = vpack.c.b16 %v884, %v884
        %v893 = vpack.c.b16 %v885, %v885
        %vm894 = vsmask.f32 7424
        %v896 = vshrl.u32 %v854, 16
        %v898 = vshll.u32 %v854, 16
        %v900 = vrot.slane %v898, 1
        %v901 = vor.u32 %v896, %v900
        %v903 = vshll.u32 %v886, 16
        %v905 = vrot.slane %v903, 1
        %v906 = vsel %vm894, %v901, %v905
        %v908 = vshrl.u32 %v855, 16
        %v910 = vshll.u32 %v855, 16
        %v912 = vrot.slane %v910, 1
        %v913 = vor.u32 %v908, %v912
        %v915 = vshll.u32 %v887, 16
        %v917 = vrot.slane %v915, 1
        %v918 = vsel %vm894, %v913, %v917
        %v920 = vshrl.u32 %v856, 16
        %v922 = vshll.u32 %v856, 16
        %v924 = vrot.slane %v922, 1
        %v925 = vor.u32 %v920, %v924
        %v927 = vshll.u32 %v888, 16
        %v929 = vrot.slane %v927, 1
        %v930 = vsel %vm894, %v925, %v929
        %v932 = vshrl.u32 %v857, 16
        %v934 = vshll.u32 %v857, 16
        %v936 = vrot.slane %v934, 1
        %v937 = vor.u32 %v932, %v936
        %v939 = vshll.u32 %v889, 16
        %v941 = vrot.slane %v939, 1
        %v942 = vsel %vm894, %v937, %v941
        %v944 = vshrl.u32 %v858, 16
        %v946 = vshll.u32 %v858, 16
        %v948 = vrot.slane %v946, 1
        %v949 = vor.u32 %v944, %v948
        %v951 = vshll.u32 %v890, 16
        %v953 = vrot.slane %v951, 1
        %v954 = vsel %vm894, %v949, %v953
        %v956 = vshrl.u32 %v859, 16
        %v958 = vshll.u32 %v859, 16
        %v960 = vrot.slane %v958, 1
        %v961 = vor.u32 %v956, %v960
        %v963 = vshll.u32 %v891, 16
        %v965 = vrot.slane %v963, 1
        %v966 = vsel %vm894, %v961, %v965
        %v968 = vshrl.u32 %v860, 16
        %v970 = vshll.u32 %v860, 16
        %v972 = vrot.slane %v970, 1
        %v973 = vor.u32 %v968, %v972
        %v975 = vshll.u32 %v892, 16
        %v977 = vrot.slane %v975, 1
        %v978 = vsel %vm894, %v973, %v977
        %v980 = vshrl.u32 %v861, 16
        %v982 = vshll.u32 %v861, 16
        %v984 = vrot.slane %v982, 1
        %v985 = vor.u32 %v980, %v984
        %v987 = vshll.u32 %v893, 16
        %v989 = vrot.slane %v987, 1
        %v990 = vsel %vm894, %v985, %v989
        %vm999 = vcmask 1046528
        %v1000 = vrot.slane %v854, 1
        %v1001 = vrot.slane %v886, 1
        %v1002 = vsel %vm999, %v1000, %v1001
        %v1003 = vrot.slane %v855, 1
        %v1004 = vrot.slane %v887, 1
        %v1005 = vsel %vm999, %v1003, %v1004
        %v1006 = vrot.slane %v856, 1
        %v1007 = vrot.slane %v888, 1
        %v1008 = vsel %vm999, %v1006, %v1007
        %v1009 = vrot.slane %v857, 1
        %v1010 = vrot.slane %v889, 1
        %v1011 = vsel %vm999, %v1009, %v1010
        %v1012 = vrot.slane %v858, 1
        %v1013 = vrot.slane %v890, 1
        %v1014 = vsel %vm999, %v1012, %v1013
        %v1015 = vrot.slane %v859, 1
        %v1016 = vrot.slane %v891, 1
        %v1017 = vsel %vm999, %v1015, %v1016
        %v1018 = vrot.slane %v860, 1
        %v1019 = vrot.slane %v892, 1
        %v1020 = vsel %vm999, %v1018, %v1019
        %v1021 = vrot.slane %v861, 1
        %v1022 = vrot.slane %v893, 1
        %v1023 = vsel %vm999, %v1021, %v1022
        %v1034 = vunpack.c.l.b16 %v816
        %v1035 = vunpack.c.l.b16 %v817
        %v1036 = vpack.c.b16 %v1035, %v1034
        %v1039 = vunpack.c.l.b16 %v818
        %v1040 = vpack.c.b16 %v1039, %v1039
        %v1042 = vshrl.u32 %v1036, 16
        %v1044 = vshll.u32 %v1036, 16
        %v1046 = vrot.slane %v1044, 1
        %v1047 = vor.u32 %v1042, %v1046
        %v1049 = vshll.u32 %v1040, 16
        %v1051 = vrot.slane %v1049, 1
        %v1052 = vsel %vm894, %v1047, %v1051
        %v1054 = vrot.slane %v1036, 1
        %v1055 = vrot.slane %v1040, 1
        %v1056 = vsel %vm999, %v1054, %v1055
        %v1060 = vunpack.c.l.b16 %v819
        %v1061 = vunpack.c.l.b16 %v820
        %v1062 = vpack.c.b16 %v1061, %v1060
        %v1065 = vunpack.c.l.b16 %v821
        %v1066 = vpack.c.b16 %v1065, %v1065
        %v1068 = vshrl.u32 %v1062, 16
        %v1070 = vshll.u32 %v1062, 16
        %v1072 = vrot.slane %v1070, 1
        %v1073 = vor.u32 %v1068, %v1072
        %v1075 = vshll.u32 %v1066, 16
        %v1077 = vrot.slane %v1075, 1
        %v1078 = vsel %vm894, %v1073, %v1077
        %v1080 = vrot.slane %v1062, 1
        %v1081 = vrot.slane %v1066, 1
        %v1082 = vsel %vm999, %v1080, %v1081
        %v1084 = vld [vmem:[%s1] sm:$0xf]
        %v1085 = vld [vmem:[%s1 + $0x4] sm:$0xf]
        %v1086 = vld [vmem:[%s1 + $0x8] sm:$0xf]
        %v1087 = vld [vmem:[%s1 + $0xc] sm:$0xf]
        %v1088 = vld [vmem:[%s1 + $0x10] sm:$0xf]
        %v1089 = vld [vmem:[%s1 + $0x14] sm:$0xf]
        %v1090 = vld [vmem:[%s1 + $0x18] sm:$0xf]
        %v1091 = vld [vmem:[%s1 + $0x1c] sm:$0xf]
        %v1092 = vld [vmem:[%s1 + $0x20] sm:$0xf]
        %v1093 = vld [vmem:[%s1 + $0x24] sm:$0xf]
        %v1094 = vld [vmem:[%s1 + $0x28] sm:$0xf]
        %v1095 = vld [vmem:[%s1 + $0x2c] sm:$0xf]
        %v1096 = vld [vmem:[%s1 + $0x30] sm:$0xf]
        %v1097 = vld [vmem:[%s1 + $0x34] sm:$0xf]
        %v1098 = vld [vmem:[%s1 + $0x38] sm:$0xf]
        %v1099 = vld [vmem:[%s1 + $0x3c] sm:$0xf]
        %v1100 = vld [vmem:[%s1 + $0x40] sm:$0xf]
        %v1101 = vld [vmem:[%s1 + $0x44] sm:$0xf]
        %v1102 = vld [vmem:[%s1 + $0x48] sm:$0xf]
        %v1103 = vld [vmem:[%s1 + $0x4c] sm:$0xf]
        %v1104 = vld [vmem:[%s1 + $0x50] sm:$0xf]
        %v1105 = vld [vmem:[%s1 + $0x54] sm:$0xf]
        %v1106 = vld [vmem:[%s1 + $0x58] sm:$0xf]
        %v1107 = vld [vmem:[%s1 + $0x5c] sm:$0xf]
        %v1108 = vld [vmem:[%s1 + $0x60] sm:$0xf]
        %v1109 = vld [vmem:[%s1 + $0x64] sm:$0xf]
        %v1110 = vld [vmem:[%s1 + $0x68] sm:$0xf]
        %v1111 = vld [vmem:[%s1 + $0x6c] sm:$0xf]
        %v1112 = vld [vmem:[%s1 + $0x70] sm:$0xf]
        %v1113 = vld [vmem:[%s1 + $0x74] sm:$0xf]
        %v1114 = vld [vmem:[%s1 + $0x78] sm:$0xf]
        %v1115 = vld [vmem:[%s1 + $0x7c] sm:$0xf]
        %v1116 = vld [vmem:[%s1 + $0x80] sm:$0xf]
        %v1117 = vld [vmem:[%s1 + $0x84] sm:$0xf]
        %v1118 = vld [vmem:[%s1 + $0x88] sm:$0xf]
        %v1119 = vld [vmem:[%s1 + $0x8c] sm:$0xf]
        %v1120 = vld [vmem:[%s1 + $0x90] sm:$0xf]
        %v1121 = vld [vmem:[%s1 + $0x94] sm:$0xf]
        %v1122 = vld [vmem:[%s1 + $0x98] sm:$0xf]
        %v1123 = vld [vmem:[%s1 + $0x9c] sm:$0xf]
        %v1124 = vld [vmem:[%s1 + $0xa0] sm:$0xf]
        %v1125 = vld [vmem:[%s1 + $0xa4] sm:$0xf]
        %v1126 = vld [vmem:[%s1 + $0xa8] sm:$0xf]
        %v1127 = vld [vmem:[%s1 + $0xac] sm:$0xf]
        %v1128 = vld [vmem:[%s1 + $0xb0] sm:$0xf]
        %v1129 = vld [vmem:[%s1 + $0xb4] sm:$0xf]
        %v1130 = vld [vmem:[%s1 + $0xb8] sm:$0xf]
        %v1131 = vld [vmem:[%s1 + $0xbc] sm:$0xf]
        %v1132 = vld [vmem:[%s1 + $0xc0] sm:$0xf]
        %v1133 = vld [vmem:[%s1 + $0xc4] sm:$0xf]
        %v1134 = vld [vmem:[%s1 + $0xc8] sm:$0xf]
        %v1135 = vld [vmem:[%s1 + $0xcc] sm:$0xf]
        %v1136 = vld [vmem:[%s1 + $0xd0] sm:$0xf]
        %v1137 = vld [vmem:[%s1 + $0xd4] sm:$0xf]
        %v1138 = vld [vmem:[%s1 + $0xd8] sm:$0xf]
        %v1139 = vld [vmem:[%s1 + $0xdc] sm:$0xf]
        %v1140 = vld [vmem:[%s1 + $0xe0] sm:$0xf]
        %v1141 = vld [vmem:[%s1 + $0xe4] sm:$0xf]
        %v1142 = vld [vmem:[%s1 + $0xe8] sm:$0xf]
        %v1143 = vld [vmem:[%s1 + $0xec] sm:$0xf]
        %v1144 = vld [vmem:[%s1 + $0xf0] sm:$0xf]
        %v1145 = vld [vmem:[%s1 + $0xf4] sm:$0xf]
        %v1146 = vld [vmem:[%s1 + $0xf8] sm:$0xf]
        %v1147 = vld [vmem:[%s1 + $0xfc] sm:$0xf]
        %v1148 = vld [vmem:[%s1 + $0x100] sm:$0xf]
        %v1149 = vld [vmem:[%s1 + $0x104] sm:$0xf]
        %v1150 = vld [vmem:[%s1 + $0x108] sm:$0xf]
        %v1151 = vld [vmem:[%s1 + $0x10c] sm:$0xf]
        %v1152 = vld [vmem:[%s1 + $0x110] sm:$0xf]
        %v1153 = vld [vmem:[%s1 + $0x114] sm:$0xf]
        %v1154 = vld [vmem:[%s1 + $0x118] sm:$0xf]
        %v1155 = vld [vmem:[%s1 + $0x11c] sm:$0xf]
        %v1156 = vld [vmem:[%s1 + $0x120] sm:$0xf]
        %v1157 = vld [vmem:[%s1 + $0x124] sm:$0xf]
        %v1158 = vld [vmem:[%s1 + $0x128] sm:$0xf]
        %v1159 = vld [vmem:[%s1 + $0x12c] sm:$0xf]
        %v1160 = vld [vmem:[%s1 + $0x130] sm:$0xf]
        %v1161 = vld [vmem:[%s1 + $0x134] sm:$0xf]
        %v1162 = vld [vmem:[%s1 + $0x138] sm:$0xf]
        %v1163 = vld [vmem:[%s1 + $0x13c] sm:$0xf]
        %v1164 = vld [vmem:[%s1 + $0x140] sm:$0xf]
        %v1165 = vld [vmem:[%s1 + $0x144] sm:$0xf]
        %v1166 = vld [vmem:[%s1 + $0x148] sm:$0xf]
        %v1167 = vld [vmem:[%s1 + $0x14c] sm:$0xf]
        %v1168 = vld [vmem:[%s1 + $0x150] sm:$0xf]
        %v1169 = vld [vmem:[%s1 + $0x154] sm:$0xf]
        %v1170 = vld [vmem:[%s1 + $0x158] sm:$0xf]
        %v1171 = vld [vmem:[%s1 + $0x15c] sm:$0xf]
        %v1172 = vld [vmem:[%s1 + $0x160] sm:$0xf]
        %v1173 = vld [vmem:[%s1 + $0x164] sm:$0xf]
        %v1174 = vld [vmem:[%s1 + $0x168] sm:$0xf]
        %v1175 = vld [vmem:[%s1 + $0x16c] sm:$0xf]
        %v1176 = vld [vmem:[%s1 + $0x170] sm:$0xf]
        %v1177 = vld [vmem:[%s1 + $0x174] sm:$0xf]
        %v1178 = vld [vmem:[%s1 + $0x178] sm:$0xf]
        %v1179 = vld [vmem:[%s1 + $0x17c] sm:$0xf]
        %v1180 = vld [vmem:[%s1 + $0x180] sm:$0xf]
        %v1181 = vld [vmem:[%s1 + $0x184] sm:$0xf]
        %v1182 = vld [vmem:[%s1 + $0x188] sm:$0xf]
        %v1183 = vld [vmem:[%s1 + $0x18c] sm:$0xf]
        %v1184 = vld [vmem:[%s1 + $0x190] sm:$0xf]
        %v1185 = vld [vmem:[%s1 + $0x194] sm:$0xf]
        %v1186 = vld [vmem:[%s1 + $0x198] sm:$0xf]
        %v1187 = vld [vmem:[%s1 + $0x19c] sm:$0xf]
        %v1188 = vld [vmem:[%s1 + $0x1a0] sm:$0xf]
        %v1189 = vld [vmem:[%s1 + $0x1a4] sm:$0xf]
        %v1190 = vld [vmem:[%s1 + $0x1a8] sm:$0xf]
        %v1191 = vld [vmem:[%s1 + $0x1ac] sm:$0xf]
        %v1192 = vld [vmem:[%s1 + $0x1b0] sm:$0xf]
        %v1193 = vld [vmem:[%s1 + $0x1b4] sm:$0xf]
        %v1194 = vld [vmem:[%s1 + $0x1b8] sm:$0xf]
        %v1195 = vld [vmem:[%s1 + $0x1bc] sm:$0xf]
        %v1196 = vld [vmem:[%s1 + $0x1c0] sm:$0xf]
        %v1197 = vld [vmem:[%s1 + $0x1c4] sm:$0xf]
        %v1198 = vld [vmem:[%s1 + $0x1c8] sm:$0xf]
        %v1199 = vld [vmem:[%s1 + $0x1cc] sm:$0xf]
        %v1200 = vld [vmem:[%s1 + $0x1d0] sm:$0xf]
        %v1201 = vld [vmem:[%s1 + $0x1d4] sm:$0xf]
        %v1202 = vld [vmem:[%s1 + $0x1d8] sm:$0xf]
        %v1203 = vld [vmem:[%s1 + $0x1dc] sm:$0xf]
        %v1204 = vld [vmem:[%s1 + $0x1e0] sm:$0xf]
        %v1205 = vld [vmem:[%s1 + $0x1e4] sm:$0xf]
        %v1206 = vld [vmem:[%s1 + $0x1e8] sm:$0xf]
        %v1207 = vld [vmem:[%s1 + $0x1ec] sm:$0xf]
        %v1208 = vld [vmem:[%s1 + $0x1f0] sm:$0xf]
        %v1209 = vld [vmem:[%s1 + $0x1f4] sm:$0xf]
        %v1210 = vld [vmem:[%s1 + $0x1f8] sm:$0xf]
        %v1211 = vld [vmem:[%s1 + $0x1fc] sm:$0xf]
        %v1212 = vld [vmem:[%s1 + $0x200] sm:$0xf]
        %v1213 = vld [vmem:[%s1 + $0x204] sm:$0xf]
        %v1214 = vld [vmem:[%s1 + $0x208] sm:$0xf]
        %v1215 = vld [vmem:[%s1 + $0x20c] sm:$0xf]
        %v1216 = vld [vmem:[%s1 + $0x210] sm:$0xf]
        %v1217 = vld [vmem:[%s1 + $0x214] sm:$0xf]
        %v1218 = vld [vmem:[%s1 + $0x218] sm:$0xf]
        %v1219 = vld [vmem:[%s1 + $0x21c] sm:$0xf]
        %v1220 = vld [vmem:[%s1 + $0x220] sm:$0xf]
        %v1221 = vld [vmem:[%s1 + $0x224] sm:$0xf]
        %v1222 = vld [vmem:[%s1 + $0x228] sm:$0xf]
        %v1223 = vld [vmem:[%s1 + $0x22c] sm:$0xf]
        %v1224 = vld [vmem:[%s1 + $0x230] sm:$0xf]
        %v1225 = vld [vmem:[%s1 + $0x234] sm:$0xf]
        %v1226 = vld [vmem:[%s1 + $0x238] sm:$0xf]
        %v1227 = vld [vmem:[%s1 + $0x23c] sm:$0xf]
        %v1372 = vunpack.c.l.b16 %v1084
        %v1373 = vunpack.c.l.b16 %v1085
        %v1374 = vunpack.c.l.b16 %v1086
        %v1375 = vunpack.c.l.b16 %v1087
        %v1376 = vunpack.c.l.b16 %v1088
        %v1377 = vunpack.c.l.b16 %v1089
        %v1378 = vunpack.c.l.b16 %v1090
        %v1379 = vunpack.c.l.b16 %v1091
        %v1380 = vunpack.c.l.b16 %v1092
        %v1381 = vunpack.c.l.b16 %v1093
        %v1382 = vunpack.c.l.b16 %v1094
        %v1383 = vunpack.c.l.b16 %v1095
        %v1384 = vunpack.c.l.b16 %v1096
        %v1385 = vunpack.c.l.b16 %v1097
        %v1386 = vunpack.c.l.b16 %v1098
        %v1387 = vunpack.c.l.b16 %v1099
        %v1388 = vunpack.c.l.b16 %v1100
        %v1389 = vunpack.c.l.b16 %v1101
        %v1390 = vunpack.c.l.b16 %v1102
        %v1391 = vunpack.c.l.b16 %v1103
        %v1392 = vunpack.c.l.b16 %v1104
        %v1393 = vunpack.c.l.b16 %v1105
        %v1394 = vunpack.c.l.b16 %v1106
        %v1395 = vunpack.c.l.b16 %v1107
        %v1396 = vunpack.c.l.b16 %v1108
        %v1397 = vunpack.c.l.b16 %v1109
        %v1398 = vunpack.c.l.b16 %v1110
        %v1399 = vunpack.c.l.b16 %v1111
        %v1400 = vunpack.c.l.b16 %v1112
        %v1401 = vunpack.c.l.b16 %v1113
        %v1402 = vunpack.c.l.b16 %v1114
        %v1403 = vunpack.c.l.b16 %v1115
        %v1404 = vunpack.c.l.b16 %v1116
        %v1405 = vunpack.c.l.b16 %v1117
        %v1406 = vunpack.c.l.b16 %v1118
        %v1407 = vunpack.c.l.b16 %v1119
        %v1408 = vunpack.c.l.b16 %v1120
        %v1409 = vunpack.c.l.b16 %v1121
        %v1410 = vunpack.c.l.b16 %v1122
        %v1411 = vunpack.c.l.b16 %v1123
        %v1412 = vunpack.c.l.b16 %v1124
        %v1413 = vunpack.c.l.b16 %v1125
        %v1414 = vunpack.c.l.b16 %v1126
        %v1415 = vunpack.c.l.b16 %v1127
        %v1416 = vunpack.c.l.b16 %v1128
        %v1417 = vunpack.c.l.b16 %v1129
        %v1418 = vunpack.c.l.b16 %v1130
        %v1419 = vunpack.c.l.b16 %v1131
        %v1420 = vunpack.c.l.b16 %v1132
        %v1421 = vunpack.c.l.b16 %v1133
        %v1422 = vunpack.c.l.b16 %v1134
        %v1423 = vunpack.c.l.b16 %v1135
        %v1424 = vunpack.c.l.b16 %v1136
        %v1425 = vunpack.c.l.b16 %v1137
        %v1426 = vunpack.c.l.b16 %v1138
        %v1427 = vunpack.c.l.b16 %v1139
        %v1428 = vunpack.c.l.b16 %v1140
        %v1429 = vunpack.c.l.b16 %v1141
        %v1430 = vunpack.c.l.b16 %v1142
        %v1431 = vunpack.c.l.b16 %v1143
        %v1432 = vunpack.c.l.b16 %v1144
        %v1433 = vunpack.c.l.b16 %v1145
        %v1434 = vunpack.c.l.b16 %v1146
        %v1435 = vunpack.c.l.b16 %v1147
        %v1436 = vunpack.c.l.b16 %v1148
        %v1437 = vunpack.c.l.b16 %v1149
        %v1438 = vunpack.c.l.b16 %v1150
        %v1439 = vunpack.c.l.b16 %v1151
        %v1440 = vunpack.c.l.b16 %v1152
        %v1441 = vunpack.c.l.b16 %v1153
        %v1442 = vunpack.c.l.b16 %v1154
        %v1443 = vunpack.c.l.b16 %v1155
        %v1444 = vunpack.c.l.b16 %v1156
        %v1445 = vunpack.c.l.b16 %v1157
        %v1446 = vunpack.c.l.b16 %v1158
        %v1447 = vunpack.c.l.b16 %v1159
        %v1448 = vunpack.c.l.b16 %v1160
        %v1449 = vunpack.c.l.b16 %v1161
        %v1450 = vunpack.c.l.b16 %v1162
        %v1451 = vunpack.c.l.b16 %v1163
        %v1452 = vunpack.c.l.b16 %v1164
        %v1453 = vunpack.c.l.b16 %v1165
        %v1454 = vunpack.c.l.b16 %v1166
        %v1455 = vunpack.c.l.b16 %v1167
        %v1456 = vunpack.c.l.b16 %v1168
        %v1457 = vunpack.c.l.b16 %v1169
        %v1458 = vunpack.c.l.b16 %v1170
        %v1459 = vunpack.c.l.b16 %v1171
        %v1460 = vunpack.c.l.b16 %v1172
        %v1461 = vunpack.c.l.b16 %v1173
        %v1462 = vunpack.c.l.b16 %v1174
        %v1463 = vunpack.c.l.b16 %v1175
        %v1464 = vunpack.c.l.b16 %v1176
        %v1465 = vunpack.c.l.b16 %v1177
        %v1466 = vunpack.c.l.b16 %v1178
        %v1467 = vunpack.c.l.b16 %v1179
        %v1468 = vunpack.c.l.b16 %v1180
        %v1469 = vunpack.c.l.b16 %v1181
        %v1470 = vunpack.c.l.b16 %v1182
        %v1471 = vunpack.c.l.b16 %v1183
        %v1472 = vunpack.c.l.b16 %v1184
        %v1473 = vunpack.c.l.b16 %v1185
        %v1474 = vunpack.c.l.b16 %v1186
        %v1475 = vunpack.c.l.b16 %v1187
        %v1476 = vunpack.c.l.b16 %v1188
        %v1477 = vunpack.c.l.b16 %v1189
        %v1478 = vunpack.c.l.b16 %v1190
        %v1479 = vunpack.c.l.b16 %v1191
        %v1480 = vunpack.c.l.b16 %v1192
        %v1481 = vunpack.c.l.b16 %v1193
        %v1482 = vunpack.c.l.b16 %v1194
        %v1483 = vunpack.c.l.b16 %v1195
        %v1484 = vunpack.c.l.b16 %v1196
        %v1485 = vunpack.c.l.b16 %v1197
        %v1486 = vunpack.c.l.b16 %v1198
        %v1487 = vunpack.c.l.b16 %v1199
        %v1488 = vunpack.c.l.b16 %v1200
        %v1489 = vunpack.c.l.b16 %v1201
        %v1490 = vunpack.c.l.b16 %v1202
        %v1491 = vunpack.c.l.b16 %v1203
        %v1492 = vunpack.c.l.b16 %v1204
        %v1493 = vunpack.c.l.b16 %v1205
        %v1494 = vunpack.c.l.b16 %v1206
        %v1495 = vunpack.c.l.b16 %v1207
        %v1496 = vunpack.c.l.b16 %v1208
        %v1497 = vunpack.c.l.b16 %v1209
        %v1498 = vunpack.c.l.b16 %v1210
        %v1499 = vunpack.c.l.b16 %v1211
        %v1500 = vunpack.c.l.b16 %v1212
        %v1501 = vunpack.c.l.b16 %v1213
        %v1502 = vunpack.c.l.b16 %v1214
        %v1503 = vunpack.c.l.b16 %v1215
        %v1504 = vunpack.c.l.b16 %v1216
        %v1505 = vunpack.c.l.b16 %v1217
        %v1506 = vunpack.c.l.b16 %v1218
        %v1507 = vunpack.c.l.b16 %v1219
        %v1508 = vunpack.c.l.b16 %v1220
        %v1509 = vunpack.c.l.b16 %v1221
        %v1510 = vunpack.c.l.b16 %v1222
        %v1511 = vunpack.c.l.b16 %v1223
        %v1512 = vunpack.c.l.b16 %v1224
        %v1513 = vunpack.c.l.b16 %v1225
        %v1514 = vunpack.c.l.b16 %v1226
        %v1515 = vunpack.c.l.b16 %v1227
        %v1516 = vpack.c.b16 %v1373, %v1372
        %v1517 = vpack.c.b16 %v1375, %v1374
        %v1518 = vpack.c.b16 %v1377, %v1376
        %v1519 = vpack.c.b16 %v1379, %v1378
        %v1520 = vpack.c.b16 %v1381, %v1380
        %v1521 = vpack.c.b16 %v1383, %v1382
        %v1522 = vpack.c.b16 %v1385, %v1384
        %v1523 = vpack.c.b16 %v1387, %v1386
        %v1524 = vpack.c.b16 %v1389, %v1388
        %v1525 = vpack.c.b16 %v1391, %v1390
        %v1526 = vpack.c.b16 %v1393, %v1392
        %v1527 = vpack.c.b16 %v1395, %v1394
        %v1528 = vpack.c.b16 %v1397, %v1396
        %v1529 = vpack.c.b16 %v1399, %v1398
        %v1530 = vpack.c.b16 %v1401, %v1400
        %v1531 = vpack.c.b16 %v1403, %v1402
        %v1532 = vpack.c.b16 %v1405, %v1404
        %v1533 = vpack.c.b16 %v1407, %v1406
        %v1534 = vpack.c.b16 %v1409, %v1408
        %v1535 = vpack.c.b16 %v1411, %v1410
        %v1536 = vpack.c.b16 %v1413, %v1412
        %v1537 = vpack.c.b16 %v1415, %v1414
        %v1538 = vpack.c.b16 %v1417, %v1416
        %v1539 = vpack.c.b16 %v1419, %v1418
        %v1540 = vpack.c.b16 %v1421, %v1420
        %v1541 = vpack.c.b16 %v1423, %v1422
        %v1542 = vpack.c.b16 %v1425, %v1424
        %v1543 = vpack.c.b16 %v1427, %v1426
        %v1544 = vpack.c.b16 %v1429, %v1428
        %v1545 = vpack.c.b16 %v1431, %v1430
        %v1546 = vpack.c.b16 %v1433, %v1432
        %v1547 = vpack.c.b16 %v1435, %v1434
        %v1548 = vpack.c.b16 %v1437, %v1436
        %v1549 = vpack.c.b16 %v1439, %v1438
        %v1550 = vpack.c.b16 %v1441, %v1440
        %v1551 = vpack.c.b16 %v1443, %v1442
        %v1552 = vpack.c.b16 %v1445, %v1444
        %v1553 = vpack.c.b16 %v1447, %v1446
        %v1554 = vpack.c.b16 %v1449, %v1448
        %v1555 = vpack.c.b16 %v1451, %v1450
        %v1556 = vpack.c.b16 %v1453, %v1452
        %v1557 = vpack.c.b16 %v1455, %v1454
        %v1558 = vpack.c.b16 %v1457, %v1456
        %v1559 = vpack.c.b16 %v1459, %v1458
        %v1560 = vpack.c.b16 %v1461, %v1460
        %v1561 = vpack.c.b16 %v1463, %v1462
        %v1562 = vpack.c.b16 %v1465, %v1464
        %v1563 = vpack.c.b16 %v1467, %v1466
        %v1564 = vpack.c.b16 %v1469, %v1468
        %v1565 = vpack.c.b16 %v1471, %v1470
        %v1566 = vpack.c.b16 %v1473, %v1472
        %v1567 = vpack.c.b16 %v1475, %v1474
        %v1568 = vpack.c.b16 %v1477, %v1476
        %v1569 = vpack.c.b16 %v1479, %v1478
        %v1570 = vpack.c.b16 %v1481, %v1480
        %v1571 = vpack.c.b16 %v1483, %v1482
        %v1572 = vpack.c.b16 %v1485, %v1484
        %v1573 = vpack.c.b16 %v1487, %v1486
        %v1574 = vpack.c.b16 %v1489, %v1488
        %v1575 = vpack.c.b16 %v1491, %v1490
        %v1576 = vpack.c.b16 %v1493, %v1492
        %v1577 = vpack.c.b16 %v1495, %v1494
        %v1578 = vpack.c.b16 %v1497, %v1496
        %v1579 = vpack.c.b16 %v1499, %v1498
        %v1580 = vpack.c.b16 %v1501, %v1500
        %v1581 = vpack.c.b16 %v1503, %v1502
        %v1582 = vpack.c.b16 %v1505, %v1504
        %v1583 = vpack.c.b16 %v1507, %v1506
        %v1584 = vpack.c.b16 %v1509, %v1508
        %v1585 = vpack.c.b16 %v1511, %v1510
        %v1586 = vpack.c.b16 %v1513, %v1512
        %v1587 = vpack.c.b16 %v1515, %v1514
        %1660 = vmatprep.subr.bf16.mxu0 0
        %1661 = vmatpush1.bf16.msra.mxu0 %v1516
        %1662 = vmatprep.subr.bf16.mxu0 0
        %1663 = vmatpush1.bf16.msra.mxu0 %v1517
        %1664 = vmatprep.subr.bf16.mxu0 0
        %1665 = vmatpush1.bf16.msra.mxu0 %v1518
        %1666 = vmatprep.subr.bf16.mxu0 0
        %1667 = vmatpush1.bf16.msra.mxu0 %v1519
        %1668 = vmatprep.subr.bf16.mxu0 0
        %1669 = vmatpush1.bf16.msra.mxu0 %v1520
        %1670 = vmatprep.subr.bf16.mxu0 0
        %1671 = vmatpush1.bf16.msra.mxu0 %v1521
        %1672 = vmatprep.subr.bf16.mxu0 0
        %1673 = vmatpush1.bf16.msra.mxu0 %v1522
        %1674 = vmatprep.subr.bf16.mxu0 0
        %1675 = vmatpush1.bf16.msra.mxu0 %v1523
        %1676 = vmatprep.subr.bf16.mxu0 0
        %1677 = vmatpush1.bf16.msra.mxu0 %v1524
        %1678 = vmatprep.subr.bf16.mxu0 0
        %1679 = vmatpush1.bf16.msra.mxu0 %v1525
        %1680 = vmatprep.subr.bf16.mxu0 0
        %1681 = vmatpush1.bf16.msra.mxu0 %v1526
        %1682 = vmatprep.subr.bf16.mxu0 0
        %1683 = vmatpush1.bf16.msra.mxu0 %v1527
        %1684 = vmatprep.subr.bf16.mxu0 0
        %1685 = vmatpush1.bf16.msra.mxu0 %v1528
        %1686 = vmatprep.subr.bf16.mxu0 0
        %1687 = vmatpush1.bf16.msra.mxu0 %v1529
        %1688 = vmatprep.subr.bf16.mxu0 0
        %1689 = vmatpush1.bf16.msra.mxu0 %v1530
        %1690 = vmatprep.subr.bf16.mxu0 0
        %1691 = vmatpush1.bf16.msra.mxu0 %v1531
        %1692 = vmatprep.mubr.bf16.mxu0 %v906
        %1693 = vmatmul.mubr.bf16.gmra.mrb[0].mxu0 %v854
        %v1694 = vpop.f32.mrb[0].mxu0
        %v1695 = vadd.f32 0.0, %v1694
        %v1696 = vpop.f32.mrb[0].mxu0
        %v1697 = vpop.f32.mrb[0].mxu0
        %v1698 = vadd.f32 0.0, %v1697
        %v1699 = vpop.f32.mrb[0].mxu0
        %1700 = vmatprep.mubr.bf16.mxu0 %v918
        %1701 = vmatmul.mubr.bf16.gmra.mrb[0].mxu0 %v855
        %v1702 = vpop.f32.mrb[0].mxu0
        %v1703 = vadd.f32 0.0, %v1702
        %v1704 = vpop.f32.mrb[0].mxu0
        %v1705 = vpop.f32.mrb[0].mxu0
        %v1706 = vadd.f32 0.0, %v1705
        %v1707 = vpop.f32.mrb[0].mxu0
        %1708 = vmatprep.mubr.bf16.mxu0 %v930
        %1709 = vmatmul.mubr.bf16.gmra.mrb[0].mxu0 %v856
        %v1710 = vpop.f32.mrb[0].mxu0
        %v1711 = vadd.f32 0.0, %v1710
        %v1712 = vpop.f32.mrb[0].mxu0
        %v1713 = vpop.f32.mrb[0].mxu0
        %v1714 = vadd.f32 0.0, %v1713
        %v1715 = vpop.f32.mrb[0].mxu0
        %1716 = vmatprep.mubr.bf16.mxu0 %v942
        %1717 = vmatmul.mubr.bf16.gmra.mrb[0].mxu0 %v857
        %v1718 = vpop.f32.mrb[0].mxu0
        %v1719 = vadd.f32 0.0, %v1718
        %v1720 = vpop.f32.mrb[0].mxu0
        %v1721 = vpop.f32.mrb[0].mxu0
        %v1722 = vadd.f32 0.0, %v1721
        %v1723 = vpop.f32.mrb[0].mxu0
        %1724 = vmatprep.mubr.bf16.mxu0 %v954
        %1725 = vmatmul.mubr.bf16.gmra.mrb[0].mxu0 %v858
        %v1726 = vpop.f32.mrb[0].mxu0
        %v1727 = vadd.f32 0.0, %v1726
        %v1728 = vpop.f32.mrb[0].mxu0
        %v1729 = vpop.f32.mrb[0].mxu0
        %v1730 = vadd.f32 0.0, %v1729
        %v1731 = vpop.f32.mrb[0].mxu0
        %1732 = vmatprep.mubr.bf16.mxu0 %v966
        %1733 = vmatmul.mubr.bf16.gmra.mrb[0].mxu0 %v859
        %v1734 = vpop.f32.mrb[0].mxu0
        %v1735 = vadd.f32 0.0, %v1734
        %v1736 = vpop.f32.mrb[0].mxu0
        %v1737 = vpop.f32.mrb[0].mxu0
        %v1738 = vadd.f32 0.0, %v1737
        %v1739 = vpop.f32.mrb[0].mxu0
        %1740 = vmatprep.mubr.bf16.mxu0 %v978
        %1741 = vmatmul.mubr.bf16.gmra.mrb[0].mxu0 %v860
        %v1742 = vpop.f32.mrb[0].mxu0
        %v1743 = vadd.f32 0.0, %v1742
        %v1744 = vpop.f32.mrb[0].mxu0
        %v1745 = vpop.f32.mrb[0].mxu0
        %v1746 = vadd.f32 0.0, %v1745
        %v1747 = vpop.f32.mrb[0].mxu0
        %1748 = vmatprep.mubr.bf16.mxu0 %v990
        %1749 = vmatmul.mubr.bf16.gmra.mrb[0].mxu0 %v861
        %v1750 = vpop.f32.mrb[0].mxu0
        %v1751 = vadd.f32 0.0, %v1750
        %v1752 = vpop.f32.mrb[0].mxu0
        %v1753 = vpop.f32.mrb[0].mxu0
        %v1754 = vadd.f32 0.0, %v1753
        %v1755 = vpop.f32.mrb[0].mxu0
        %1756 = vdwg.mxu0
        %1757 = vmatprep.subr.bf16.mxu0 0
        %1758 = vmatpush1.bf16.msra.mxu0 %v1532
        %1759 = vmatprep.subr.bf16.mxu0 0
        %1760 = vmatpush1.bf16.msra.mxu0 %v1533
        %1761 = vmatprep.subr.bf16.mxu0 0
        %1762 = vmatpush1.bf16.msra.mxu0 %v1534
        %1763 = vmatprep.subr.bf16.mxu0 0
        %1764 = vmatpush1.bf16.msra.mxu0 %v1535
        %1765 = vmatprep.subr.bf16.mxu0 0
        %1766 = vmatpush1.bf16.msra.mxu0 %v1536
        %1767 = vmatprep.subr.bf16.mxu0 0
        %1768 = vmatpush1.bf16.msra.mxu0 %v1537
        %1769 = vmatprep.subr.bf16.mxu0 0
        %1770 = vmatpush1.bf16.msra.mxu0 %v1538
        %1771 = vmatprep.subr.bf16.mxu0 0
        %1772 = vmatpush1.bf16.msra.mxu0 %v1539
        %1773 = vmatprep.subr.bf16.mxu0 0
        %1774 = vmatpush1.bf16.msra.mxu0 %v1540
        %1775 = vmatprep.subr.bf16.mxu0 0
        %1776 = vmatpush1.bf16.msra.mxu0 %v1541
        %1777 = vmatprep.subr.bf16.mxu0 0
        %1778 = vmatpush1.bf16.msra.mxu0 %v1542
        %1779 = vmatprep.subr.bf16.mxu0 0
        %1780 = vmatpush1.bf16.msra.mxu0 %v1543
        %1781 = vmatprep.subr.bf16.mxu0 0
        %1782 = vmatpush1.bf16.msra.mxu0 %v1544
        %1783 = vmatprep.subr.bf16.mxu0 0
        %1784 = vmatpush1.bf16.msra.mxu0 %v1545
        %1785 = vmatprep.subr.bf16.mxu0 0
        %1786 = vmatpush1.bf16.msra.mxu0 %v1546
        %1787 = vmatprep.subr.bf16.mxu0 0
        %1788 = vmatpush1.bf16.msra.mxu0 %v1547
        %1789 = vmatprep.mubr.bf16.mxu0 %v855
        %1790 = vmatmul.mubr.bf16.gmra.mrb[0].mxu0 %v1002
        %v1791 = vpop.f32.mrb[0].mxu0
        %v1792 = vadd.f32 %v1695, %v1791
        %v1793 = vpop.f32.mrb[0].mxu0
        %v1794 = vpop.f32.mrb[0].mxu0
        %v1795 = vadd.f32 %v1698, %v1794
        %v1796 = vpop.f32.mrb[0].mxu0
        %1797 = vmatprep.mubr.bf16.mxu0 %v856
        %1798 = vmatmul.mubr.bf16.gmra.mrb[0].mxu0 %v1005
        %v1799 = vpop.f32.mrb[0].mxu0
        %v1800 = vadd.f32 %v1703, %v1799
        %v1801 = vpop.f32.mrb[0].mxu0
        %v1802 = vpop.f32.mrb[0].mxu0
        %v1803 = vadd.f32 %v1706, %v1802
        %v1804 = vpop.f32.mrb[0].mxu0
        %1805 = vmatprep.mubr.bf16.mxu0 %v857
        %1806 = vmatmul.mubr.bf16.gmra.mrb[0].mxu0 %v1008
        %v1807 = vpop.f32.mrb[0].mxu0
        %v1808 = vadd.f32 %v1711, %v1807
        %v1809 = vpop.f32.mrb[0].mxu0
        %v1810 = vpop.f32.mrb[0].mxu0
        %v1811 = vadd.f32 %v1714, %v1810
        %v1812 = vpop.f32.mrb[0].mxu0
        %1813 = vmatprep.mubr.bf16.mxu0 %v858
        %1814 = vmatmul.mubr.bf16.gmra.mrb[0].mxu0 %v1011
        %v1815 = vpop.f32.mrb[0].mxu0
        %v1816 = vadd.f32 %v1719, %v1815
        %v1817 = vpop.f32.mrb[0].mxu0
        %v1818 = vpop.f32.mrb[0].mxu0
        %v1819 = vadd.f32 %v1722, %v1818
        %v1820 = vpop.f32.mrb[0].mxu0
        %1821 = vmatprep.mubr.bf16.mxu0 %v859
        %1822 = vmatmul.mubr.bf16.gmra.mrb[0].mxu0 %v1014
        %v1823 = vpop.f32.mrb[0].mxu0
        %v1824 = vadd.f32 %v1727, %v1823
        %v1825 = vpop.f32.mrb[0].mxu0
        %v1826 = vpop.f32.mrb[0].mxu0
        %v1827 = vadd.f32 %v1730, %v1826
        %v1828 = vpop.f32.mrb[0].mxu0
        %1829 = vmatprep.mubr.bf16.mxu0 %v860
        %1830 = vmatmul.mubr.bf16.gmra.mrb[0].mxu0 %v1017
        %v1831 = vpop.f32.mrb[0].mxu0
        %v1832 = vadd.f32 %v1735, %v1831
        %v1833 = vpop.f32.mrb[0].mxu0
        %v1834 = vpop.f32.mrb[0].mxu0
        %v1835 = vadd.f32 %v1738, %v1834
        %v1836 = vpop.f32.mrb[0].mxu0
        %1837 = vmatprep.mubr.bf16.mxu0 %v861
        %1838 = vmatmul.mubr.bf16.gmra.mrb[0].mxu0 %v1020
        %v1839 = vpop.f32.mrb[0].mxu0
        %v1840 = vadd.f32 %v1743, %v1839
        %v1841 = vpop.f32.mrb[0].mxu0
        %v1842 = vpop.f32.mrb[0].mxu0
        %v1843 = vadd.f32 %v1746, %v1842
        %v1844 = vpop.f32.mrb[0].mxu0
        %1845 = vmatprep.mubr.bf16.mxu0 %v1036
        %1846 = vmatmul.mubr.bf16.gmra.mrb[0].mxu0 %v1023
        %v1847 = vpop.f32.mrb[0].mxu0
        %v1848 = vadd.f32 %v1751, %v1847
        %v1849 = vpop.f32.mrb[0].mxu0
        %v1850 = vpop.f32.mrb[0].mxu0
        %v1851 = vadd.f32 %v1754, %v1850
        %v1852 = vpop.f32.mrb[0].mxu0
        %1853 = vdwg.mxu0
        %1854 = vmatprep.subr.bf16.mxu0 0
        %1855 = vmatpush1.bf16.msra.mxu0 %v1548
        %1856 = vmatprep.subr.bf16.mxu0 0
        %1857 = vmatpush1.bf16.msra.mxu0 %v1549
        %1858 = vmatprep.subr.bf16.mxu0 0
        %1859 = vmatpush1.bf16.msra.mxu0 %v1550
        %1860 = vmatprep.subr.bf16.mxu0 0
        %1861 = vmatpush1.bf16.msra.mxu0 %v1551
        %1862 = vmatprep.subr.bf16.mxu0 0
        %1863 = vmatpush1.bf16.msra.mxu0 %v1552
        %1864 = vmatprep.subr.bf16.mxu0 0
        %1865 = vmatpush1.bf16.msra.mxu0 %v1553
        %1866 = vmatprep.subr.bf16.mxu0 0
        %1867 = vmatpush1.bf16.msra.mxu0 %v1554
        %1868 = vmatprep.subr.bf16.mxu0 0
        %1869 = vmatpush1.bf16.msra.mxu0 %v1555
        %1870 = vmatprep.subr.bf16.mxu0 0
        %1871 = vmatpush1.bf16.msra.mxu0 %v1556
        %1872 = vmatprep.subr.bf16.mxu0 0
        %1873 = vmatpush1.bf16.msra.mxu0 %v1557
        %1874 = vmatprep.subr.bf16.mxu0 0
        %1875 = vmatpush1.bf16.msra.mxu0 %v1558
        %1876 = vmatprep.subr.bf16.mxu0 0
        %1877 = vmatpush1.bf16.msra.mxu0 %v1559
        %1878 = vmatprep.subr.bf16.mxu0 0
        %1879 = vmatpush1.bf16.msra.mxu0 %v1560
        %1880 = vmatprep.subr.bf16.mxu0 0
        %1881 = vmatpush1.bf16.msra.mxu0 %v1561
        %1882 = vmatprep.subr.bf16.mxu0 0
        %1883 = vmatpush1.bf16.msra.mxu0 %v1562
        %1884 = vmatprep.subr.bf16.mxu0 0
        %1885 = vmatpush1.bf16.msra.mxu0 %v1563
        %1886 = vmatprep.mubr.bf16.mxu0 %v1005
        %1887 = vmatmul.mubr.bf16.gmra.mrb[0].mxu0 %v918
        %v1888 = vpop.f32.mrb[0].mxu0
        %v1889 = vadd.f32 %v1792, %v1888
        %v1890 = vpop.f32.mrb[0].mxu0
        %v1891 = vpop.f32.mrb[0].mxu0
        %v1892 = vadd.f32 %v1795, %v1891
        %v1893 = vpop.f32.mrb[0].mxu0
        %1894 = vmatprep.mubr.bf16.mxu0 %v1008
        %1895 = vmatmul.mubr.bf16.gmra.mrb[0].mxu0 %v930
        %v1896 = vpop.f32.mrb[0].mxu0
        %v1897 = vadd.f32 %v1800, %v1896
        %v1898 = vpop.f32.mrb[0].mxu0
        %v1899 = vpop.f32.mrb[0].mxu0
        %v1900 = vadd.f32 %v1803, %v1899
        %v1901 = vpop.f32.mrb[0].mxu0
        %1902 = vmatprep.mubr.bf16.mxu0 %v1011
        %1903 = vmatmul.mubr.bf16.gmra.mrb[0].mxu0 %v942
        %v1904 = vpop.f32.mrb[0].mxu0
        %v1905 = vadd.f32 %v1808, %v1904
        %v1906 = vpop.f32.mrb[0].mxu0
        %v1907 = vpop.f32.mrb[0].mxu0
        %v1908 = vadd.f32 %v1811, %v1907
        %v1909 = vpop.f32.mrb[0].mxu0
        %1910 = vmatprep.mubr.bf16.mxu0 %v1014
        %1911 = vmatmul.mubr.bf16.gmra.mrb[0].mxu0 %v954
        %v1912 = vpop.f32.mrb[0].mxu0
        %v1913 = vadd.f32 %v1816, %v1912
        %v1914 = vpop.f32.mrb[0].mxu0
        %v1915 = vpop.f32.mrb[0].mxu0
        %v1916 = vadd.f32 %v1819, %v1915
        %v1917 = vpop.f32.mrb[0].mxu0
        %1918 = vmatprep.mubr.bf16.mxu0 %v1017
        %1919 = vmatmul.mubr.bf16.gmra.mrb[0].mxu0 %v966
        %v1920 = vpop.f32.mrb[0].mxu0
        %v1921 = vadd.f32 %v1824, %v1920
        %v1922 = vpop.f32.mrb[0].mxu0
        %v1923 = vpop.f32.mrb[0].mxu0
        %v1924 = vadd.f32 %v1827, %v1923
        %v1925 = vpop.f32.mrb[0].mxu0
        %1926 = vmatprep.mubr.bf16.mxu0 %v1020
        %1927 = vmatmul.mubr.bf16.gmra.mrb[0].mxu0 %v978
        %v1928 = vpop.f32.mrb[0].mxu0
        %v1929 = vadd.f32 %v1832, %v1928
        %v1930 = vpop.f32.mrb[0].mxu0
        %v1931 = vpop.f32.mrb[0].mxu0
        %v1932 = vadd.f32 %v1835, %v1931
        %v1933 = vpop.f32.mrb[0].mxu0
        %1934 = vmatprep.mubr.bf16.mxu0 %v1023
        %1935 = vmatmul.mubr.bf16.gmra.mrb[0].mxu0 %v990
        %v1936 = vpop.f32.mrb[0].mxu0
        %v1937 = vadd.f32 %v1840, %v1936
        %v1938 = vpop.f32.mrb[0].mxu0
        %v1939 = vpop.f32.mrb[0].mxu0
        %v1940 = vadd.f32 %v1843, %v1939
        %v1941 = vpop.f32.mrb[0].mxu0
        %1942 = vmatprep.mubr.bf16.mxu0 %v1056
        %1943 = vmatmul.mubr.bf16.gmra.mrb[0].mxu0 %v1052
        %v1944 = vpop.f32.mrb[0].mxu0
        %v1945 = vadd.f32 %v1848, %v1944
        %v1946 = vpop.f32.mrb[0].mxu0
        %v1947 = vpop.f32.mrb[0].mxu0
        %v1948 = vadd.f32 %v1851, %v1947
        %v1949 = vpop.f32.mrb[0].mxu0
        %1950 = vdwg.mxu0
        %1951 = vmatprep.subr.bf16.mxu0 0
        %1952 = vmatpush1.bf16.msra.mxu0 %v1564
        %1953 = vmatprep.subr.bf16.mxu0 0
        %1954 = vmatpush1.bf16.msra.mxu0 %v1565
        %1955 = vmatprep.subr.bf16.mxu0 0
        %1956 = vmatpush1.bf16.msra.mxu0 %v1566
        %1957 = vmatprep.subr.bf16.mxu0 0
        %1958 = vmatpush1.bf16.msra.mxu0 %v1567
        %1959 = vmatprep.subr.bf16.mxu0 0
        %1960 = vmatpush1.bf16.msra.mxu0 %v1568
        %1961 = vmatprep.subr.bf16.mxu0 0
        %1962 = vmatpush1.bf16.msra.mxu0 %v1569
        %1963 = vmatprep.subr.bf16.mxu0 0
        %1964 = vmatpush1.bf16.msra.mxu0 %v1570
        %1965 = vmatprep.subr.bf16.mxu0 0
        %1966 = vmatpush1.bf16.msra.mxu0 %v1571
        %1967 = vmatprep.subr.bf16.mxu0 0
        %1968 = vmatpush1.bf16.msra.mxu0 %v1572
        %1969 = vmatprep.subr.bf16.mxu0 0
        %1970 = vmatpush1.bf16.msra.mxu0 %v1573
        %1971 = vmatprep.subr.bf16.mxu0 0
        %1972 = vmatpush1.bf16.msra.mxu0 %v1574
        %1973 = vmatprep.subr.bf16.mxu0 0
        %1974 = vmatpush1.bf16.msra.mxu0 %v1575
        %1975 = vmatprep.subr.bf16.mxu0 0
        %1976 = vmatpush1.bf16.msra.mxu0 %v1576
        %1977 = vmatprep.subr.bf16.mxu0 0
        %1978 = vmatpush1.bf16.msra.mxu0 %v1577
        %1979 = vmatprep.subr.bf16.mxu0 0
        %1980 = vmatpush1.bf16.msra.mxu0 %v1578
        %1981 = vmatprep.subr.bf16.mxu0 0
        %1982 = vmatpush1.bf16.msra.mxu0 %v1579
        %1983 = vmatprep.mubr.bf16.mxu0 %v930
        %1984 = vmatmul.mubr.bf16.gmra.mrb[0].mxu0 %v856
        %v1985 = vpop.f32.mrb[0].mxu0
        %v1986 = vadd.f32 %v1889, %v1985
        %v1987 = vpop.f32.mrb[0].mxu0
        %v1988 = vpop.f32.mrb[0].mxu0
        %v1989 = vadd.f32 %v1892, %v1988
        %v1990 = vpop.f32.mrb[0].mxu0
        %1991 = vmatprep.mubr.bf16.mxu0 %v942
        %1992 = vmatmul.mubr.bf16.gmra.mrb[0].mxu0 %v857
        %v1993 = vpop.f32.mrb[0].mxu0
        %v1994 = vadd.f32 %v1897, %v1993
        %v1995 = vpop.f32.mrb[0].mxu0
        %v1996 = vpop.f32.mrb[0].mxu0
        %v1997 = vadd.f32 %v1900, %v1996
        %v1998 = vpop.f32.mrb[0].mxu0
        %1999 = vmatprep.mubr.bf16.mxu0 %v954
        %2000 = vmatmul.mubr.bf16.gmra.mrb[0].mxu0 %v858
        %v2001 = vpop.f32.mrb[0].mxu0
        %v2002 = vadd.f32 %v1905, %v2001
        %v2003 = vpop.f32.mrb[0].mxu0
        %v2004 = vpop.f32.mrb[0].mxu0
        %v2005 = vadd.f32 %v1908, %v2004
        %v2006 = vpop.f32.mrb[0].mxu0
        %2007 = vmatprep.mubr.bf16.mxu0 %v966
        %2008 = vmatmul.mubr.bf16.gmra.mrb[0].mxu0 %v859
        %v2009 = vpop.f32.mrb[0].mxu0
        %v2010 = vadd.f32 %v1913, %v2009
        %v2011 = vpop.f32.mrb[0].mxu0
        %v2012 = vpop.f32.mrb[0].mxu0
        %v2013 = vadd.f32 %v1916, %v2012
        %v2014 = vpop.f32.mrb[0].mxu0
        %2015 = vmatprep.mubr.bf16.mxu0 %v978
        %2016 = vmatmul.mubr.bf16.gmra.mrb[0].mxu0 %v860
        %v2017 = vpop.f32.mrb[0].mxu0
        %v2018 = vadd.f32 %v1921, %v2017
        %v2019 = vpop.f32.mrb[0].mxu0
        %v2020 = vpop.f32.mrb[0].mxu0
        %v2021 = vadd.f32 %v1924, %v2020
        %v2022 = vpop.f32.mrb[0].mxu0
        %2023 = vmatprep.mubr.bf16.mxu0 %v990
        %2024 = vmatmul.mubr.bf16.gmra.mrb[0].mxu0 %v861
        %v2025 = vpop.f32.mrb[0].mxu0
        %v2026 = vadd.f32 %v1929, %v2025
        %v2027 = vpop.f32.mrb[0].mxu0
        %v2028 = vpop.f32.mrb[0].mxu0
        %v2029 = vadd.f32 %v1932, %v2028
        %v2030 = vpop.f32.mrb[0].mxu0
        %2031 = vmatprep.mubr.bf16.mxu0 %v1052
        %2032 = vmatmul.mubr.bf16.gmra.mrb[0].mxu0 %v1036
        %v2033 = vpop.f32.mrb[0].mxu0
        %v2034 = vadd.f32 %v1937, %v2033
        %v2035 = vpop.f32.mrb[0].mxu0
        %v2036 = vpop.f32.mrb[0].mxu0
        %v2037 = vadd.f32 %v1940, %v2036
        %v2038 = vpop.f32.mrb[0].mxu0
        %2039 = vmatprep.mubr.bf16.mxu0 %v1078
        %2040 = vmatmul.mubr.bf16.gmra.mrb[0].mxu0 %v1062
        %v2041 = vpop.f32.mrb[0].mxu0
        %v2042 = vadd.f32 %v1945, %v2041
        %v2043 = vpop.f32.mrb[0].mxu0
        %v2044 = vpop.f32.mrb[0].mxu0
        %v2045 = vadd.f32 %v1948, %v2044
        %v2046 = vpop.f32.mrb[0].mxu0
        %2047 = vdwg.mxu0
        %2048 = vmatprep.subr.bf16.mxu0 0
        %2049 = vmatpush1.bf16.msra.mxu0 %v1580
        %2050 = vmatprep.subr.bf16.mxu0 0
        %2051 = vmatpush1.bf16.msra.mxu0 %v1581
        %2052 = vmatprep.subr.bf16.mxu0 0
        %2053 = vmatpush1.bf16.msra.mxu0 %v1582
        %2054 = vmatprep.subr.bf16.mxu0 0
        %2055 = vmatpush1.bf16.msra.mxu0 %v1583
        %2056 = vmatprep.subr.bf16.mxu0 0
        %2057 = vmatpush1.bf16.msra.mxu0 %v1584
        %2058 = vmatprep.subr.bf16.mxu0 0
        %2059 = vmatpush1.bf16.msra.mxu0 %v1585
        %2060 = vmatprep.subr.bf16.mxu0 0
        %2061 = vmatpush1.bf16.msra.mxu0 %v1586
        %2062 = vmatprep.subr.bf16.mxu0 0
        %2063 = vmatpush1.bf16.msra.mxu0 %v1587
        %2064 = vmatprep.subr.bf16.mxu0 0
        %2065 = vmatpush1.bf16.msra.mxu0 0
        %2066 = vmatprep.subr.bf16.mxu0 0
        %2067 = vmatpush1.bf16.msra.mxu0 0
        %2068 = vmatprep.subr.bf16.mxu0 0
        %2069 = vmatpush1.bf16.msra.mxu0 0
        %2070 = vmatprep.subr.bf16.mxu0 0
        %2071 = vmatpush1.bf16.msra.mxu0 0
        %2072 = vmatprep.subr.bf16.mxu0 0
        %2073 = vmatpush1.bf16.msra.mxu0 0
        %2074 = vmatprep.subr.bf16.mxu0 0
        %2075 = vmatpush1.bf16.msra.mxu0 0
        %2076 = vmatprep.subr.bf16.mxu0 0
        %2077 = vmatpush1.bf16.msra.mxu0 0
        %2078 = vmatprep.subr.bf16.mxu0 0
        %2079 = vmatpush1.bf16.msra.mxu0 0
        %2080 = vmatprep.mubr.bf16.mxu0 0
        %2081 = vmatmul.mubr.bf16.gmra.mrb[0].mxu0 %v1008
        %v2082 = vpop.f32.mrb[0].mxu0
        %v2083 = vadd.f32 %v1986, %v2082
        %v2084 = vpop.f32.mrb[0].mxu0
        %v2085 = vpop.f32.mrb[0].mxu0
        %v2086 = vadd.f32 %v1989, %v2085
        %v2087 = vpop.f32.mrb[0].mxu0
        %2088 = vmatprep.mubr.bf16.mxu0 0
        %2089 = vmatmul.mubr.bf16.gmra.mrb[0].mxu0 %v1011
        %v2090 = vpop.f32.mrb[0].mxu0
        %v2091 = vadd.f32 %v1994, %v2090
        %v2092 = vpop.f32.mrb[0].mxu0
        %v2093 = vpop.f32.mrb[0].mxu0
        %v2094 = vadd.f32 %v1997, %v2093
        %v2095 = vpop.f32.mrb[0].mxu0
        %2096 = vmatprep.mubr.bf16.mxu0 0
        %2097 = vmatmul.mubr.bf16.gmra.mrb[0].mxu0 %v1014
        %v2098 = vpop.f32.mrb[0].mxu0
        %v2099 = vadd.f32 %v2002, %v2098
        %v2100 = vpop.f32.mrb[0].mxu0
        %v2101 = vpop.f32.mrb[0].mxu0
        %v2102 = vadd.f32 %v2005, %v2101
        %v2103 = vpop.f32.mrb[0].mxu0
        %2104 = vmatprep.mubr.bf16.mxu0 0
        %2105 = vmatmul.mubr.bf16.gmra.mrb[0].mxu0 %v1017
        %v2106 = vpop.f32.mrb[0].mxu0
        %v2107 = vadd.f32 %v2010, %v2106
        %v2108 = vpop.f32.mrb[0].mxu0
        %v2109 = vpop.f32.mrb[0].mxu0
        %v2110 = vadd.f32 %v2013, %v2109
        %v2111 = vpop.f32.mrb[0].mxu0
        %2112 = vmatprep.mubr.bf16.mxu0 0
        %2113 = vmatmul.mubr.bf16.gmra.mrb[0].mxu0 %v1020
        %v2114 = vpop.f32.mrb[0].mxu0
        %v2115 = vadd.f32 %v2018, %v2114
        %v2116 = vpop.f32.mrb[0].mxu0
        %v2117 = vpop.f32.mrb[0].mxu0
        %v2118 = vadd.f32 %v2021, %v2117
        %v2119 = vpop.f32.mrb[0].mxu0
        %2120 = vmatprep.mubr.bf16.mxu0 0
        %2121 = vmatmul.mubr.bf16.gmra.mrb[0].mxu0 %v1023
        %v2122 = vpop.f32.mrb[0].mxu0
        %v2123 = vadd.f32 %v2026, %v2122
        %v2124 = vpop.f32.mrb[0].mxu0
        %v2125 = vpop.f32.mrb[0].mxu0
        %v2126 = vadd.f32 %v2029, %v2125
        %v2127 = vpop.f32.mrb[0].mxu0
        %2128 = vmatprep.mubr.bf16.mxu0 0
        %2129 = vmatmul.mubr.bf16.gmra.mrb[0].mxu0 %v1056
        %v2130 = vpop.f32.mrb[0].mxu0
        %v2131 = vadd.f32 %v2034, %v2130
        %v2132 = vpop.f32.mrb[0].mxu0
        %v2133 = vpop.f32.mrb[0].mxu0
        %v2134 = vadd.f32 %v2037, %v2133
        %v2135 = vpop.f32.mrb[0].mxu0
        %2136 = vmatprep.mubr.bf16.mxu0 0
        %2137 = vmatmul.mubr.bf16.gmra.mrb[0].mxu0 %v1082
        %v2138 = vpop.f32.mrb[0].mxu0
        %v2139 = vadd.f32 %v2042, %v2138
        %v2140 = vpop.f32.mrb[0].mxu0
        %v2141 = vpop.f32.mrb[0].mxu0
        %v2142 = vadd.f32 %v2045, %v2141
        %v2143 = vpop.f32.mrb[0].mxu0
        %2144 = vdwg.mxu0
        %v2145 = vadd.f32 %v2083, %v2086
        %v2146 = vadd.f32 %v2145, %v2091
        %v2147 = vadd.f32 %v2146, %v2094
        %v2148 = vadd.f32 %v2147, %v2099
        %v2149 = vadd.f32 %v2148, %v2102
        %v2150 = vadd.f32 %v2149, %v2107
        %v2151 = vadd.f32 %v2150, %v2110
        %v2152 = vadd.f32 %v2151, %v2115
        %v2153 = vadd.f32 %v2152, %v2118
        %v2154 = vadd.f32 %v2153, %v2123
        %v2155 = vadd.f32 %v2154, %v2126
        %v2156 = vadd.f32 %v2155, %v2131
        %v2157 = vadd.f32 %v2156, %v2134
        %v2158 = vadd.f32 %v2157, %v2139
        %v2159 = vadd.f32 %v2158, %v2142
        %v2160 = vrot.slane %v2159, 4
        %v2161 = vadd.f32 %v2159, %v2160
        %v2162 = vrot.slane %v2161, 2
        %v2163 = vadd.f32 %v2161, %v2162
        %v2164 = vrot.slane %v2163, 1
        %v2165 = vadd.f32 %v2163, %v2164
        %v2166 = vmul.f32 %v2083, %v2083
        %v2167 = vmul.f32 %v2086, %v2086
        %v2168 = vmul.f32 %v2091, %v2091
        %v2169 = vmul.f32 %v2094, %v2094
        %v2170 = vmul.f32 %v2099, %v2099
        %v2171 = vmul.f32 %v2102, %v2102
        %v2172 = vmul.f32 %v2107, %v2107
        %v2173 = vmul.f32 %v2110, %v2110
        %v2174 = vmul.f32 %v2115, %v2115
        %v2175 = vmul.f32 %v2118, %v2118
        %v2176 = vmul.f32 %v2123, %v2123
        %v2177 = vmul.f32 %v2126, %v2126
        %v2178 = vmul.f32 %v2131, %v2131
        %v2179 = vmul.f32 %v2134, %v2134
        %v2180 = vmul.f32 %v2139, %v2139
        %v2181 = vmul.f32 %v2142, %v2142
        %v2182 = vadd.f32 %v2166, %v2167
        %v2183 = vadd.f32 %v2182, %v2168
        %v2184 = vadd.f32 %v2183, %v2169
        %v2185 = vadd.f32 %v2184, %v2170
        %v2186 = vadd.f32 %v2185, %v2171
        %v2187 = vadd.f32 %v2186, %v2172
        %v2188 = vadd.f32 %v2187, %v2173
        %v2189 = vadd.f32 %v2188, %v2174
        %v2190 = vadd.f32 %v2189, %v2175
        %v2191 = vadd.f32 %v2190, %v2176
        %v2192 = vadd.f32 %v2191, %v2177
        %v2193 = vadd.f32 %v2192, %v2178
        %v2194 = vadd.f32 %v2193, %v2179
        %v2195 = vadd.f32 %v2194, %v2180
        %v2196 = vadd.f32 %v2195, %v2181
        %v2197 = vrot.slane %v2196, 4
        %v2198 = vadd.f32 %v2196, %v2197
        %v2199 = vrot.slane %v2198, 2
        %v2200 = vadd.f32 %v2198, %v2199
        %v2201 = vrot.slane %v2200, 1
        %v2202 = vadd.f32 %v2200, %v2201
        %vm2203 = vcmask 1040384
        %v2204 = vsel %vm2203, %v2165, %v2202
        %2205 = vst [vmem:[%s246] sm:$0x3] %v2204
        %v2222 = vrot.slane %v2083, 7
        %v2223 = vrot.slane %v2086, 7
        %v2224 = vsel %vm2203, %v2222, %v2223
        %v2225 = vrot.slane %v2091, 7
        %v2226 = vrot.slane %v2094, 7
        %v2227 = vsel %vm2203, %v2225, %v2226
        %v2228 = vrot.slane %v2099, 7
        %v2229 = vrot.slane %v2102, 7
        %v2230 = vsel %vm2203, %v2228, %v2229
        %v2231 = vrot.slane %v2107, 7
        %v2232 = vrot.slane %v2110, 7
        %v2233 = vsel %vm2203, %v2231, %v2232
        %v2234 = vrot.slane %v2115, 7
        %v2235 = vrot.slane %v2118, 7
        %v2236 = vsel %vm2203, %v2234, %v2235
        %v2237 = vrot.slane %v2123, 7
        %v2238 = vrot.slane %v2126, 7
        %v2239 = vsel %vm2203, %v2237, %v2238
        %v2240 = vrot.slane %v2131, 7
        %v2241 = vrot.slane %v2134, 7
        %v2242 = vsel %vm2203, %v2240, %v2241
        %v2243 = vrot.slane %v2139, 7
        %v2244 = vrot.slane %v2142, 7
        %v2245 = vsel %vm2203, %v2243, %v2244
        %v2270 = vsel %vm2203, 0.0, %v2222
        %v2271 = vsel %vm2203, 0.0, %v2225
        %v2272 = vsel %vm2203, 0.0, %v2228
        %v2273 = vsel %vm2203, 0.0, %v2231
        %v2274 = vsel %vm2203, 0.0, %v2234
        %v2275 = vsel %vm2203, 0.0, %v2237
        %v2276 = vsel %vm2203, 0.0, %v2240
        %v2277 = vsel %vm2203, 0.0, %v2243
        %v2278 = vsel %vm2203, %v2223, 0.0
        %v2279 = vsel %vm2203, %v2226, 0.0
        %v2280 = vsel %vm2203, %v2229, 0.0
        %v2281 = vsel %vm2203, %v2232, 0.0
        %v2282 = vsel %vm2203, %v2235, 0.0
        %v2283 = vsel %vm2203, %v2238, 0.0
        %v2284 = vsel %vm2203, %v2241, 0.0
        %v2285 = vsel %vm2203, %v2244, 0.0
        %v2286 = vpack.c.bf16 %v2224, %v2270
        %v2287 = vpack.c.bf16 %v2278, %v2278
        %v2288 = vpack.c.bf16 %v2227, %v2271
        %v2289 = vpack.c.bf16 %v2279, %v2279
        %v2290 = vpack.c.bf16 %v2230, %v2272
        %v2291 = vpack.c.bf16 %v2280, %v2280
        %v2292 = vpack.c.bf16 %v2233, %v2273
        %v2293 = vpack.c.bf16 %v2281, %v2281
        %v2294 = vpack.c.bf16 %v2236, %v2274
        %v2295 = vpack.c.bf16 %v2282, %v2282
        %v2296 = vpack.c.bf16 %v2239, %v2275
        %v2297 = vpack.c.bf16 %v2283, %v2283
        %v2298 = vpack.c.bf16 %v2242, %v2276
        %v2299 = vpack.c.bf16 %v2284, %v2284
        %v2300 = vpack.c.bf16 %v2245, %v2277
        %v2301 = vpack.c.bf16 %v2285, %v2285
        %v2318 = vunpack.c.l.b16 %v2286
        %v2319 = vunpack.c.h.b16 %v2286
        %v2320 = vunpack.c.l.b16 %v2287
        %v2321 = vunpack.c.l.b16 %v2288
        %v2322 = vunpack.c.h.b16 %v2288
        %v2323 = vunpack.c.l.b16 %v2289
        %v2324 = vunpack.c.l.b16 %v2290
        %v2325 = vunpack.c.h.b16 %v2290
        %v2326 = vunpack.c.l.b16 %v2291
        %v2327 = vunpack.c.l.b16 %v2292
        %v2328 = vunpack.c.h.b16 %v2292
        %v2329 = vunpack.c.l.b16 %v2293
        %v2330 = vunpack.c.l.b16 %v2294
        %v2331 = vunpack.c.h.b16 %v2294
        %v2332 = vunpack.c.l.b16 %v2295
        %v2333 = vunpack.c.l.b16 %v2296
        %v2334 = vunpack.c.h.b16 %v2296
        %v2335 = vunpack.c.l.b16 %v2297
        %v2336 = vunpack.c.l.b16 %v2298
        %v2337 = vunpack.c.h.b16 %v2298
        %v2338 = vunpack.c.l.b16 %v2299
        %v2339 = vunpack.c.l.b16 %v2300
        %v2340 = vunpack.c.h.b16 %v2300
        %v2341 = vunpack.c.l.b16 %v2301
        %v2342 = vpack.c.b16 %v2318, %v2318
        %v2343 = vpack.c.b16 %v2319, %v2319
        %v2344 = vpack.c.b16 %v2320, %v2320
        %v2345 = vpack.c.b16 %v2321, %v2321
        %v2346 = vpack.c.b16 %v2322, %v2322
        %v2347 = vpack.c.b16 %v2323, %v2323
        %v2348 = vpack.c.b16 %v2324, %v2324
        %v2349 = vpack.c.b16 %v2325, %v2325
        %v2350 = vpack.c.b16 %v2326, %v2326
        %v2351 = vpack.c.b16 %v2327, %v2327
        %v2352 = vpack.c.b16 %v2328, %v2328
        %v2353 = vpack.c.b16 %v2329, %v2329
        %v2354 = vpack.c.b16 %v2330, %v2330
        %v2355 = vpack.c.b16 %v2331, %v2331
        %v2356 = vpack.c.b16 %v2332, %v2332
        %v2357 = vpack.c.b16 %v2333, %v2333
        %v2358 = vpack.c.b16 %v2334, %v2334
        %v2359 = vpack.c.b16 %v2335, %v2335
        %v2360 = vpack.c.b16 %v2336, %v2336
        %v2361 = vpack.c.b16 %v2337, %v2337
        %v2362 = vpack.c.b16 %v2338, %v2338
        %v2363 = vpack.c.b16 %v2339, %v2339
        %v2364 = vpack.c.b16 %v2340, %v2340
        %v2365 = vpack.c.b16 %v2341, %v2341
        %2390 = vst [vmem:[%s261] sm:$0xf] %v2342
        %2391 = vst [vmem:[%s261 + $0x4] sm:$0xf] %v2343
        %2392 = vst [vmem:[%s261 + $0x8] sm:$0x1] %v2344
        %2393 = vst [vmem:[%s261 + $0xc] sm:$0xf] %v2345
        %2394 = vst [vmem:[%s261 + $0x10] sm:$0xf] %v2346
        %2395 = vst [vmem:[%s261 + $0x14] sm:$0x1] %v2347
        %2396 = vst [vmem:[%s261 + $0x18] sm:$0xf] %v2348
        %2397 = vst [vmem:[%s261 + $0x1c] sm:$0xf] %v2349
        %2398 = vst [vmem:[%s261 + $0x20] sm:$0x1] %v2350
        %2399 = vst [vmem:[%s261 + $0x24] sm:$0xf] %v2351
        %2400 = vst [vmem:[%s261 + $0x28] sm:$0xf] %v2352
        %2401 = vst [vmem:[%s261 + $0x2c] sm:$0x1] %v2353
        %2402 = vst [vmem:[%s261 + $0x30] sm:$0xf] %v2354
        %2403 = vst [vmem:[%s261 + $0x34] sm:$0xf] %v2355
        %2404 = vst [vmem:[%s261 + $0x38] sm:$0x1] %v2356
        %2405 = vst [vmem:[%s261 + $0x3c] sm:$0xf] %v2357
        %2406 = vst [vmem:[%s261 + $0x40] sm:$0xf] %v2358
        %2407 = vst [vmem:[%s261 + $0x44] sm:$0x1] %v2359
        %2408 = vst [vmem:[%s261 + $0x48] sm:$0xf] %v2360
        %2409 = vst [vmem:[%s261 + $0x4c] sm:$0xf] %v2361
        %2410 = vst [vmem:[%s261 + $0x50] sm:$0x1] %v2362
        %2411 = vst [vmem:[%s261 + $0x54] sm:$0xf] %v2363
        %2412 = vst [vmem:[%s261 + $0x58] sm:$0xf] %v2364
        %2413 = vst [vmem:[%s261 + $0x5c] sm:$0x1] %v2365
        %s2414 = smul.u32 8, %s25
        %p2415 = scmp.lt.s32.totalorder %s24, 1
        %s2416 = scalar_select %p2415, %s24, 1
        %p2417 = scmp.lt.s32.totalorder %s2414, 15
        %s2418 = scalar_select %p2417, %s2414, 15
        %s2419 = smul.addr %s2418, 3
        %s2420 = smul.addr %s2416, 48
        %s2421 = sadd.s32 %s2419, %s2420
        %s2422 = smul.addr %s2421, 4
        %s2423 = scalar_lea.vmem %s4, %s2422
        %s2424 = sand.u32 %s159, 1
        %s2425 = scalar_lea.sflag [#allocation3], %s2424
        %s2426 = sand.u32 %s159, 1
        %s2427 = smul.addr %s2426, 2
        %s2428 = scalar_lea.vmem [#allocation2], %s2427
        // Predicated region
        $region37: #{tpu_custom_call.1} parent=35 // pred_check
          %p2429 = pneg %p141
        $region38: #{tpu_custom_call.1} parent=35 // pred_check_branch
          %2431 = sbr.rel (%p2429) target = $region40
        $region39: #{tpu_custom_call.1} parent=35 // pred_region
          %s2432 = smul.u32 8, %s25
        $region40: #{tpu_custom_call.1} parent=35 // pred_fallthru
          _
        // Predicated region
        $region41: #{tpu_custom_call.1} parent=35 // pred_check
          %p2433 = pneg %p169
        $region42: #{tpu_custom_call.1} parent=35 // pred_check_branch
          %2435 = sbr.rel (%p2433) target = $region44
        $region43: #{tpu_custom_call.1} parent=35 // pred_region
          %s2437 = ssub.s32 32, 32
          %2438 = vsyncadd %s2425, %s2437
          %s2439 = smul.addr %s24, 2
          %s2440 = sadd.s32 %s25, %s2439
          %s2441 = smul.addr %s2440, 32
          %s2442 = scalar_lea.hbm %s5, %s2441
          %s2444 = sshll.u32 %s2428, 4
          %s2445 = int_to_ptr.vmem [resolvable:$true] %s2444
          %2447 = dma.vmem_to_hbm [thread:$0]  %s2445, 32, %s2442, %s2425
        $region44: #{tpu_custom_call.1} parent=35 // pred_fallthru
          _
      $region36: #{tpu_custom_call.1} parent=5 // pred_fallthru
        _
      %p2448 = scmp.le.s32.totalorder 2, %s15
      // Predicated region
      $region45: #{tpu_custom_call.1} parent=5 // pred_check
        %p2449 = pneg %p2448
      $region46: #{tpu_custom_call.1} parent=5 // pred_check_branch
        %2451 = sbr.rel (%p2449) target = $region48
      $region47: #{tpu_custom_call.1} parent=5 // pred_region
        %s2452 = ssub.s32 %s15, 2
        // Predicated region
        $region49: #{tpu_custom_call.1} parent=47 // pred_check
          %p2453 = pneg %p147
        $region50: #{tpu_custom_call.1} parent=47 // pred_check_branch
          %2455 = sbr.rel (%p2453) target = $region52
        $region51: #{tpu_custom_call.1} parent=47 // pred_region
          %s2456 = smul.u32 8, %s27
          %p2457 = scmp.lt.s32.totalorder %s26, 1
          %s2458 = scalar_select %p2457, %s26, 1
          %p2459 = scmp.lt.s32.totalorder %s2456, 15
          %s2460 = scalar_select %p2459, %s2456, 15
          %s2461 = smul.addr %s2460, 3
          %s2462 = smul.addr %s2458, 48
          %s2463 = sadd.s32 %s2461, %s2462
          %s2464 = smul.addr %s2463, 4
          %s2465 = scalar_lea.vmem %s4, %s2464
        $region52: #{tpu_custom_call.1} parent=47 // pred_fallthru
          _
        // Predicated region
        $region53: #{tpu_custom_call.1} parent=47 // pred_check
          %p2466 = pneg %p175
        $region54: #{tpu_custom_call.1} parent=47 // pred_check_branch
          %2468 = sbr.rel (%p2466) target = $region56
        $region55: #{tpu_custom_call.1} parent=47 // pred_region
          %s2469 = sand.u32 %s160, 1
          %s2470 = scalar_lea.sflag [#allocation3], %s2469
          %s2471 = sand.u32 %s160, 1
          %s2472 = smul.addr %s2471, 2
          %s2473 = scalar_lea.vmem [#allocation2], %s2472
          %2474 = dma.done %s2470, 32
        $region56: #{tpu_custom_call.1} parent=47 // pred_fallthru
          _
      $region48: #{tpu_custom_call.1} parent=5 // pred_fallthru
        _
    $region6: #{tpu_custom_call.1} parent=1 // loop_footer
      %s19 = sadd.s32 1, %s15
    $region7: #{tpu_custom_call.1} parent=1 // loop_footer_branch
      %14 = sbr.rel target = $region3
    $region8: #{tpu_custom_call.1} parent=1 // loop_exit
      _
    %2475 = vsyncpa [#allocation3], 1
    %s2476 = scalar_lea.sflag [#allocation3], 1
    %2477 = vsyncpa %s2476, 1

</llo_original>
